<compile_context>
chip_gen: v7x
topology: tpu7x:2x2x1
jax: 0.10.0
libtpu: 0.0.40
codegen_flags: <defaults>
</compile_context>

<pallas_src>
import functools
import math

import jax
import jax.numpy as jnp
import numpy as np
from jax import lax
from jax.experimental import pallas as pl
from jax.experimental.pallas import tpu as pltpu

KSIZE = 7                     # ResidualUnit conv kernel size
DILATIONS = (1, 3, 9)         # DecoderBlock residual-unit dilations


def _conv_offsets(Kt, pt):
    """Static tap offsets for every conv in the block."""
    tr = tuple(pt - k for k in range(Kt))                         # ConvTranspose taps
    res = tuple(tuple(k * d - (KSIZE - 1) * d // 2 for k in range(KSIZE))
                for d in DILATIONS)
    return tr, res


def _make_kernel(Kt, pt, mask_row, w_col, s_row):
    tr_offs, res_offs = _conv_offsets(Kt, pt)

    def kernel(xup_ref, masks_ref, wts_ref, scal_ref, out_ref):
        f32, bf16 = jnp.float32, jnp.bfloat16
        L = out_ref.shape[1]                     # padded B*T_out (lane axis)

        masks = masks_ref[...]                   # (n_off, L) 0/1 f32 edge masks
        w_all = wts_ref[...]                     # (C_out, W)  bf16 packed weights
        sc = scal_ref[...]                       # (R, 1)      f32 packed scalars

        def wsl(key):                            # packed-weight segment
            off, n = w_col[key]
            return w_all[:, off:off + n]

        def ssl(key):                            # packed-scalar segment -> (rows,1)
            off, n = s_row[key]
            return sc[off:off + n, :]

        def snake(v, a, rcp):                    # x + 1/(a+eps) * sin(a x)^2
            s = jnp.sin(a * v)
            return v + rcp * s * s

        def shift_cols(v, off):
            # out[:, t] = v[:, t + off] when the source stays inside the same
            # batch segment, else 0 (conv zero padding / batch boundary).
            if off == 0:
                return v
            rolled = pltpu.roll(v, (-off) % L, 1)          # XLU lane rotate
            i = mask_row[off]
            return rolled * masks[i:i + 1, :]              # precomputed 0/1 mask

        def conv(v, w, b, offs):
            # One MXU contraction per conv: tap-shifted copies stacked on the
            # sublane axis, then (C_out, K*C_in) @ (K*C_in, L) in a single
            # bf16-operand / f32-accumulate pass.
            taps = jnp.concatenate([shift_cols(v, o) for o in offs], axis=0)
            return jnp.dot(w, taps.astype(bf16), preferred_element_type=f32) + b

        # Snake1d(C_in) on the zero-stuffed slab (Snake(0)=0, so this equals
        # zero-stuffing after the Snake), then the ConvTranspose as a Kt-tap conv.
        x = snake(xup_ref[...], ssl("ain"), ssl("rin"))
        x = conv(x, wsl("wt"), ssl("bt"), tr_offs)          # (C_out, L)

        # Three ResidualUnits (dilations 1, 3, 9); pad trim == 0.
        for u in range(len(DILATIONS)):
            y = snake(x, ssl(("a1", u)), ssl(("r1", u)))
            y = conv(y, wsl(("w7", u)), ssl(("b7", u)), res_offs[u])
            y = snake(y, ssl(("a2", u)), ssl(("r2", u)))
            y = jnp.dot(wsl(("w1", u)), y.astype(bf16),
                        preferred_element_type=f32) + ssl(("b1", u))
            x = x + y

        out_ref[...] = x.astype(out_ref.dtype)              # full lane-dense store

    return kernel


@functools.partial(jax.jit, static_argnums=(2,))
def decoder_block_forward(x, params, stride):
    f32, bf16 = jnp.float32, jnp.bfloat16
    B, C_in, T_in = x.shape
    wt = params["wt"]                             # (C_in, C_out, 2*stride) PyTorch layout
    C_out, Kt = wt.shape[1], wt.shape[2]
    pt = math.ceil(stride / 2)
    T_out = (T_in - 1) * stride - 2 * pt + Kt
    if T_out != stride * T_in:
        raise NotImplementedError("only the even-stride DecoderBlock config is supported")

    L_out = B * T_out
    L_pad = ((L_out + 127) // 128) * 128          # lane-dense slabs for any B, T

    # ---- activation: zero-stuffed conv-transpose layout, batch folded into lanes.
    #      lane = b*T_out + stride*t_in holds x[b, :, t_in]; other lanes are 0.
    x2 = jnp.transpose(x, (1, 0, 2)).astype(f32)                       # (C_in, B, T_in)
    xu = jnp.zeros((C_in, B, T_in, stride), f32).at[..., 0].set(x2)
    xu = xu.reshape(C_in, L_out)
    xu = jnp.pad(xu, ((0, 0), (0, L_pad - L_out)))

    # ---- packed bf16 weight slab (each piece padded to a 128-lane boundary) ----
    wtf = jnp.transpose(wt, (1, 2, 0)).reshape(C_out, Kt * C_in)        # [o, k*C_in+i]
    w7f = jnp.transpose(params["w7"], (0, 1, 3, 2)).reshape(3, C_out, KSIZE * C_out)
    w_entries = [("wt", wtf.astype(f32))]
    w_entries += [(("w7", u), w7f[u].astype(f32)) for u in range(3)]
    w_entries += [(("w1", u), params["w1"][u].astype(f32)) for u in range(3)]
    w_col, pieces, coff = {}, [], 0
    for key, a in w_entries:
        n = a.shape[1]
        w_col[key] = (coff, n)
        padw = (-n) % 128
        pieces.append(jnp.pad(a, ((0, 0), (0, padw))) if padw else a)
        coff += n + padw
    wts = jnp.concatenate(pieces, axis=1).astype(bf16)                  # (C_out, coff)

    # ---- packed f32 scalar slab: alphas, hoisted 1/(alpha+eps), biases ---------
    ain = params["alpha_in"].reshape(C_in, 1).astype(f32)
    a1 = params["a1"][..., None].astype(f32)
    a2 = params["a2"][..., None].astype(f32)
    s_entries = [("ain", ain), ("rin", 1.0 / (ain + 1e-9)),
                 ("bt", params["bt"].reshape(C_out, 1).astype(f32))]
    for u in range(3):
        s_entries += [(("a1", u), a1[u]), (("r1", u), 1.0 / (a1[u] + 1e-9)),
                      (("a2", u), a2[u]), (("r2", u), 1.0 / (a2[u] + 1e-9)),
                      (("b7", u), params["b7"][u].reshape(C_out, 1).astype(f32)),
                      (("b1", u), params["b1"][u].reshape(C_out, 1).astype(f32))]
    s_row, roff = {}, 0
    for key, a in s_entries:
        s_row[key] = (roff, a.shape[0])
        roff += a.shape[0]
    scal = jnp.concatenate([a for _, a in s_entries], axis=0)           # (R, 1)

    # ---- packed 0/1 edge masks, one row per distinct nonzero tap offset --------
    tr_offs, res_offs = _conv_offsets(Kt, pt)
    all_offs = sorted({o for o in tr_offs if o != 0}
                      | {o for offs in res_offs for o in offs if o != 0})
    mask_row = {o: i for i, o in enumerate(all_offs)}
    t_loc = np.tile(np.arange(T_out, dtype=np.int64), B)
    masks_np = np.zeros((len(all_offs), L_pad), np.float32)
    for o in all_offs:
        masks_np[mask_row[o], :L_out] = ((t_loc >= -o) & (t_loc < T_out - o))
    masks = jnp.asarray(masks_np)

    # ---- pallas call ------------------------------------------------------------
    act_bytes = 4 * KSIZE * max(C_in, C_out) * L_pad        # largest tap stack
    in_bytes = xu.size * 4 + masks.size * 4 + wts.size * 2 + scal.size * 4
    vmem_limit = int(min(64 * 1024 * 1024,
                         max(16 * 1024 * 1024, 2 * in_bytes + 12 * act_bytes)))

    vmem = pl.BlockSpec(memory_space=pltpu.MemorySpace.VMEM)
    out = pl.pallas_call(
        _make_kernel(Kt, pt, mask_row, w_col, s_row),
        out_shape=jax.ShapeDtypeStruct((C_out, L_pad), f32),
        in_specs=[vmem, vmem, vmem, vmem],
        out_specs=vmem,
        compiler_params=pltpu.CompilerParams(vmem_limit_bytes=vmem_limit),
    )(xu, masks, wts, scal)

    # unfold the batch from the lane axis: (C_out, B*T_out) -> (B, C_out, T_out)
    return jnp.transpose(out[:, :L_out].reshape(C_out, B, T_out), (1, 0, 2))


# ------------------------- pure-JAX reference --------------------------------
def _snake_ref(x, alpha):
    a = alpha.reshape(1, -1, 1)
    return x + (1.0 / (a + 1e-9)) * jnp.sin(a * x) ** 2


def _conv1d_ref(x, w, b, dilation, padding):
    y = lax.conv_general_dilated(
        x, w, window_strides=(1,), padding=[(padding, padding)],
        rhs_dilation=(dilation,), dimension_numbers=("NCH", "OIH", "NCH"),
        precision=lax.Precision.HIGHEST)
    return y + b.reshape(1, -1, 1)


def _convtr1d_ref(x, wt, b, stride, padding):
    # PyTorch ConvTranspose1d (weight (C_in, C_out, K)) == lhs-dilated conv
    # with the flipped, in/out-transposed kernel.
    K = wt.shape[-1]
    w = jnp.transpose(jnp.flip(wt, axis=-1), (1, 0, 2))        # (C_out, C_in, K)
    y = lax.conv_general_dilated(
        x, w, window_strides=(1,), padding=[(K - 1 - padding, K - 1 - padding)],
        lhs_dilation=(stride,), dimension_numbers=("NCH", "OIH", "NCH"),
        precision=lax.Precision.HIGHEST)
    return y + b.reshape(1, -1, 1)


def decoder_block_reference(x, params, stride):
    x = _snake_ref(x, params["alpha_in"])
    x = _convtr1d_ref(x, params["wt"], params["bt"], stride, math.ceil(stride / 2))
    for u, d in enumerate(DILATIONS):
        y = _snake_ref(x, params["a1"][u])
        y = _conv1d_ref(y, params["w7"][u], params["b7"][u], d, (KSIZE - 1) * d // 2)
        y = _snake_ref(y, params["a2"][u])
        y = _conv1d_ref(y, params["w1"][u][:, :, None], params["b1"][u], 1, 0)
        x = x + y
    return x


if __name__ == "__main__":
    # DecoderBlock(input_dim=16, output_dim=8, stride=2): T_in=64 -> T_out=128
    B, C_IN, C_OUT, T_IN, STRIDE = 2, 16, 8, 64, 2
    KT = 2 * STRIDE

    key = jax.random.PRNGKey(0)
    ks = jax.random.split(key, 10)
    params = {
        # Snake1d alphas (module init = ones; perturbed so the test is non-trivial)
        "alpha_in": 1.0 + 0.1 * jax.random.normal(ks[0], (C_IN,), jnp.float32),
        "a1": 1.0 + 0.1 * jax.random.normal(ks[1], (3, C_OUT), jnp.float32),
        "a2": 1.0 + 0.1 * jax.random.normal(ks[2], (3, C_OUT), jnp.float32),
        # WN-ConvTranspose1d weight, PyTorch layout (C_in, C_out, K)
        "wt": 0.1 * jax.random.normal(ks[3], (C_IN, C_OUT, KT), jnp.float32),
        "bt": 0.1 * jax.random.normal(ks[4], (C_OUT,), jnp.float32),
        # WN-Conv1d(k=7) weights, PyTorch layout (unit, C_out, C_in, K)
        "w7": 0.1 * jax.random.normal(ks[5], (3, C_OUT, C_OUT, KSIZE), jnp.float32),
        "b7": 0.1 * jax.random.normal(ks[6], (3, C_OUT), jnp.float32),
        # WN-Conv1d(k=1) weights (unit, C_out, C_in)
        "w1": 0.1 * jax.random.normal(ks[7], (3, C_OUT, C_OUT), jnp.float32),
        "b1": 0.1 * jax.random.normal(ks[8], (3, C_OUT), jnp.float32),
    }
    x = jax.random.normal(ks[9], (B, C_IN, T_IN), jnp.float32)

    out = jax.block_until_ready(decoder_block_forward(x, params, STRIDE))
    ref = decoder_block_reference(x, params, STRIDE)
    # Tolerance accounts for bf16 MXU operands (f32 accumulate) vs the f32
    # HIGHEST-precision reference convs; structural bugs would be O(0.1-1).
    np.testing.assert_allclose(np.asarray(out), np.asarray(ref), rtol=2e-2, atol=2e-2)
    print("KERNEL_OK")
</pallas_src>

<mosaic_0001>
module attributes {stable_mosaic.version = 11 : i64} {
  func.func @kernel(%arg0: memref<16x256xf32, #tpu.memory_space<vmem>>, %arg1: memref<14x256xf32, #tpu.memory_space<vmem>>, %arg2: memref<8x896xbf16, #tpu.memory_space<vmem>>, %arg3: memref<184x1xf32, #tpu.memory_space<vmem>>, %arg4: memref<8x256xf32, #tpu.memory_space<vmem>>) attributes {dimension_semantics = [], scalar_prefetch = 0 : i64, scratch_operands = 0 : i64, tpu.core_type = #tpu.core_type<tc>} {
    %c0 = arith.constant 0 : index
    %c0_0 = arith.constant 0 : index
    %0 = vector.load %arg1[%c0, %c0_0] : memref<14x256xf32, #tpu.memory_space<vmem>>, vector<14x256xf32>
    %c0_1 = arith.constant 0 : index
    %c0_2 = arith.constant 0 : index
    %1 = vector.load %arg2[%c0_1, %c0_2] : memref<8x896xbf16, #tpu.memory_space<vmem>>, vector<8x896xbf16>
    %c0_3 = arith.constant 0 : index
    %c0_4 = arith.constant 0 : index
    %2 = vector.load %arg3[%c0_3, %c0_4] : memref<184x1xf32, #tpu.memory_space<vmem>>, vector<184x1xf32>
    %c0_5 = arith.constant 0 : index
    %c0_6 = arith.constant 0 : index
    %3 = vector.load %arg0[%c0_5, %c0_6] : memref<16x256xf32, #tpu.memory_space<vmem>>, vector<16x256xf32>
    %4 = vector.extract_strided_slice %2 {offsets = [0, 0], sizes = [16, 1], strides = [1, 1]} : vector<184x1xf32> to vector<16x1xf32>
    %5 = vector.extract_strided_slice %2 {offsets = [16, 0], sizes = [16, 1], strides = [1, 1]} : vector<184x1xf32> to vector<16x1xf32>
    %6 = vector.broadcast %4 : vector<16x1xf32> to vector<16x256xf32>
    %7 = arith.mulf %6, %3 : vector<16x256xf32>
    %8 = math.sin %7 : vector<16x256xf32>
    %9 = vector.broadcast %5 : vector<16x1xf32> to vector<16x256xf32>
    %10 = arith.mulf %9, %8 : vector<16x256xf32>
    %11 = arith.mulf %10, %8 : vector<16x256xf32>
    %12 = arith.addf %3, %11 : vector<16x256xf32>
    %13 = vector.extract_strided_slice %1 {offsets = [0, 0], sizes = [8, 64], strides = [1, 1]} : vector<8x896xbf16> to vector<8x64xbf16>
    %14 = vector.extract_strided_slice %2 {offsets = [32, 0], sizes = [8, 1], strides = [1, 1]} : vector<184x1xf32> to vector<8x1xf32>
    %c255_i32 = arith.constant 255 : i32
    %15 = tpu.dynamic_rotate %12 by %c255_i32 dim 1 : vector<16x256xf32>, i32 -> vector<16x256xf32>
    %16 = vector.extract_strided_slice %0 {offsets = [7, 0], sizes = [1, 256], strides = [1, 1]} : vector<14x256xf32> to vector<1x256xf32>
    %17 = vector.broadcast %16 : vector<1x256xf32> to vector<16x256xf32>
    %18 = arith.mulf %15, %17 : vector<16x256xf32>
    %c1_i32 = arith.constant 1 : i32
    %19 = tpu.dynamic_rotate %12 by %c1_i32 dim 1 : vector<16x256xf32>, i32 -> vector<16x256xf32>
    %20 = vector.extract_strided_slice %0 {offsets = [6, 0], sizes = [1, 256], strides = [1, 1]} : vector<14x256xf32> to vector<1x256xf32>
    %21 = vector.broadcast %20 : vector<1x256xf32> to vector<16x256xf32>
    %22 = arith.mulf %19, %21 : vector<16x256xf32>
    %c2_i32 = arith.constant 2 : i32
    %23 = tpu.dynamic_rotate %12 by %c2_i32 dim 1 : vector<16x256xf32>, i32 -> vector<16x256xf32>
    %24 = vector.extract_strided_slice %0 {offsets = [5, 0], sizes = [1, 256], strides = [1, 1]} : vector<14x256xf32> to vector<1x256xf32>
    %25 = vector.broadcast %24 : vector<1x256xf32> to vector<16x256xf32>
    %26 = arith.mulf %23, %25 : vector<16x256xf32>
    %27 = tpu.concatenate %18, %12, %22, %26 in 0 : vector<16x256xf32>, vector<16x256xf32>, vector<16x256xf32>, vector<16x256xf32> -> vector<64x256xf32>
    %28 = arith.truncf %27 : vector<64x256xf32> to vector<64x256xbf16>
    %cst = arith.constant dense<0.000000e+00> : vector<8x256xf32>
    %29 = tpu.matmul %13, %28, %cst {dimension_numbers = #tpu.dot_dimension_numbers<[1], [0], [0], [1], [0, 0, 1, 1], [], []>} : vector<8x64xbf16>, vector<64x256xbf16>, vector<8x256xf32> -> vector<8x256xf32>
    %30 = vector.broadcast %14 : vector<8x1xf32> to vector<8x256xf32>
    %31 = arith.addf %29, %30 : vector<8x256xf32>
    %32 = vector.extract_strided_slice %2 {offsets = [40, 0], sizes = [8, 1], strides = [1, 1]} : vector<184x1xf32> to vector<8x1xf32>
    %33 = vector.extract_strided_slice %2 {offsets = [48, 0], sizes = [8, 1], strides = [1, 1]} : vector<184x1xf32> to vector<8x1xf32>
    %34 = vector.broadcast %32 : vector<8x1xf32> to vector<8x256xf32>
    %35 = arith.mulf %34, %31 : vector<8x256xf32>
    %36 = math.sin %35 : vector<8x256xf32>
    %37 = vector.broadcast %33 : vector<8x1xf32> to vector<8x256xf32>
    %38 = arith.mulf %37, %36 : vector<8x256xf32>
    %39 = arith.mulf %38, %36 : vector<8x256xf32>
    %40 = arith.addf %31, %39 : vector<8x256xf32>
    %41 = vector.extract_strided_slice %1 {offsets = [0, 128], sizes = [8, 56], strides = [1, 1]} : vector<8x896xbf16> to vector<8x56xbf16>
    %42 = vector.extract_strided_slice %2 {offsets = [72, 0], sizes = [8, 1], strides = [1, 1]} : vector<184x1xf32> to vector<8x1xf32>
    %c3_i32 = arith.constant 3 : i32
    %43 = tpu.dynamic_rotate %40 by %c3_i32 dim 1 : vector<8x256xf32>, i32 -> vector<8x256xf32>
    %44 = vector.extract_strided_slice %0 {offsets = [4, 0], sizes = [1, 256], strides = [1, 1]} : vector<14x256xf32> to vector<1x256xf32>
    %45 = vector.broadcast %44 : vector<1x256xf32> to vector<8x256xf32>
    %46 = arith.mulf %43, %45 : vector<8x256xf32>
    %c2_i32_7 = arith.constant 2 : i32
    %47 = tpu.dynamic_rotate %40 by %c2_i32_7 dim 1 : vector<8x256xf32>, i32 -> vector<8x256xf32>
    %48 = vector.extract_strided_slice %0 {offsets = [5, 0], sizes = [1, 256], strides = [1, 1]} : vector<14x256xf32> to vector<1x256xf32>
    %49 = vector.broadcast %48 : vector<1x256xf32> to vector<8x256xf32>
    %50 = arith.mulf %47, %49 : vector<8x256xf32>
    %c1_i32_8 = arith.constant 1 : i32
    %51 = tpu.dynamic_rotate %40 by %c1_i32_8 dim 1 : vector<8x256xf32>, i32 -> vector<8x256xf32>
    %52 = vector.extract_strided_slice %0 {offsets = [6, 0], sizes = [1, 256], strides = [1, 1]} : vector<14x256xf32> to vector<1x256xf32>
    %53 = vector.broadcast %52 : vector<1x256xf32> to vector<8x256xf32>
    %54 = arith.mulf %51, %53 : vector<8x256xf32>
    %c255_i32_9 = arith.constant 255 : i32
    %55 = tpu.dynamic_rotate %40 by %c255_i32_9 dim 1 : vector<8x256xf32>, i32 -> vector<8x256xf32>
    %56 = vector.extract_strided_slice %0 {offsets = [7, 0], sizes = [1, 256], strides = [1, 1]} : vector<14x256xf32> to vector<1x256xf32>
    %57 = vector.broadcast %56 : vector<1x256xf32> to vector<8x256xf32>
    %58 = arith.mulf %55, %57 : vector<8x256xf32>
    %c254_i32 = arith.constant 254 : i32
    %59 = tpu.dynamic_rotate %40 by %c254_i32 dim 1 : vector<8x256xf32>, i32 -> vector<8x256xf32>
    %60 = vector.extract_strided_slice %0 {offsets = [8, 0], sizes = [1, 256], strides = [1, 1]} : vector<14x256xf32> to vector<1x256xf32>
    %61 = vector.broadcast %60 : vector<1x256xf32> to vector<8x256xf32>
    %62 = arith.mulf %59, %61 : vector<8x256xf32>
    %c253_i32 = arith.constant 253 : i32
    %63 = tpu.dynamic_rotate %40 by %c253_i32 dim 1 : vector<8x256xf32>, i32 -> vector<8x256xf32>
    %64 = vector.extract_strided_slice %0 {offsets = [9, 0], sizes = [1, 256], strides = [1, 1]} : vector<14x256xf32> to vector<1x256xf32>
    %65 = vector.broadcast %64 : vector<1x256xf32> to vector<8x256xf32>
    %66 = arith.mulf %63, %65 : vector<8x256xf32>
    %67 = tpu.concatenate %46, %50, %54, %40, %58, %62, %66 in 0 : vector<8x256xf32>, vector<8x256xf32>, vector<8x256xf32>, vector<8x256xf32>, vector<8x256xf32>, vector<8x256xf32>, vector<8x256xf32> -> vector<56x256xf32>
    %68 = arith.truncf %67 : vector<56x256xf32> to vector<56x256xbf16>
    %cst_10 = arith.constant dense<0.000000e+00> : vector<8x256xf32>
    %69 = tpu.matmul %41, %68, %cst_10 {dimension_numbers = #tpu.dot_dimension_numbers<[1], [0], [0], [1], [0, 0, 1, 1], [], []>} : vector<8x56xbf16>, vector<56x256xbf16>, vector<8x256xf32> -> vector<8x256xf32>
    %70 = vector.broadcast %42 : vector<8x1xf32> to vector<8x256xf32>
    %71 = arith.addf %69, %70 : vector<8x256xf32>
    %72 = vector.extract_strided_slice %2 {offsets = [56, 0], sizes = [8, 1], strides = [1, 1]} : vector<184x1xf32> to vector<8x1xf32>
    %73 = vector.extract_strided_slice %2 {offsets = [64, 0], sizes = [8, 1], strides = [1, 1]} : vector<184x1xf32> to vector<8x1xf32>
    %74 = vector.broadcast %72 : vector<8x1xf32> to vector<8x256xf32>
    %75 = arith.mulf %74, %71 : vector<8x256xf32>
    %76 = math.sin %75 : vector<8x256xf32>
    %77 = vector.broadcast %73 : vector<8x1xf32> to vector<8x256xf32>
    %78 = arith.mulf %77, %76 : vector<8x256xf32>
    %79 = arith.mulf %78, %76 : vector<8x256xf32>
    %80 = arith.addf %71, %79 : vector<8x256xf32>
    %81 = vector.extract_strided_slice %1 {offsets = [0, 512], sizes = [8, 8], strides = [1, 1]} : vector<8x896xbf16> to vector<8x8xbf16>
    %82 = arith.truncf %80 : vector<8x256xf32> to vector<8x256xbf16>
    %cst_11 = arith.constant dense<0.000000e+00> : vector<8x256xf32>
    %83 = tpu.matmul %81, %82, %cst_11 {dimension_numbers = #tpu.dot_dimension_numbers<[1], [0], [0], [1], [0, 0, 1, 1], [], []>} : vector<8x8xbf16>, vector<8x256xbf16>, vector<8x256xf32> -> vector<8x256xf32>
    %84 = vector.extract_strided_slice %2 {offsets = [80, 0], sizes = [8, 1], strides = [1, 1]} : vector<184x1xf32> to vector<8x1xf32>
    %85 = vector.broadcast %84 : vector<8x1xf32> to vector<8x256xf32>
    %86 = arith.addf %83, %85 : vector<8x256xf32>
    %87 = arith.addf %31, %86 : vector<8x256xf32>
    %88 = vector.extract_strided_slice %2 {offsets = [88, 0], sizes = [8, 1], strides = [1, 1]} : vector<184x1xf32> to vector<8x1xf32>
    %89 = vector.extract_strided_slice %2 {offsets = [96, 0], sizes = [8, 1], strides = [1, 1]} : vector<184x1xf32> to vector<8x1xf32>
    %90 = vector.broadcast %88 : vector<8x1xf32> to vector<8x256xf32>
    %91 = arith.mulf %90, %87 : vector<8x256xf32>
    %92 = math.sin %91 : vector<8x256xf32>
    %93 = vector.broadcast %89 : vector<8x1xf32> to vector<8x256xf32>
    %94 = arith.mulf %93, %92 : vector<8x256xf32>
    %95 = arith.mulf %94, %92 : vector<8x256xf32>
    %96 = arith.addf %87, %95 : vector<8x256xf32>
    %97 = vector.extract_strided_slice %1 {offsets = [0, 256], sizes = [8, 56], strides = [1, 1]} : vector<8x896xbf16> to vector<8x56xbf16>
    %98 = vector.extract_strided_slice %2 {offsets = [120, 0], sizes = [8, 1], strides = [1, 1]} : vector<184x1xf32> to vector<8x1xf32>
    %c9_i32 = arith.constant 9 : i32
    %99 = tpu.dynamic_rotate %96 by %c9_i32 dim 1 : vector<8x256xf32>, i32 -> vector<8x256xf32>
    %100 = vector.extract_strided_slice %0 {offsets = [2, 0], sizes = [1, 256], strides = [1, 1]} : vector<14x256xf32> to vector<1x256xf32>
    %101 = vector.broadcast %100 : vector<1x256xf32> to vector<8x256xf32>
    %102 = arith.mulf %99, %101 : vector<8x256xf32>
    %c6_i32 = arith.constant 6 : i32
    %103 = tpu.dynamic_rotate %96 by %c6_i32 dim 1 : vector<8x256xf32>, i32 -> vector<8x256xf32>
    %104 = vector.extract_strided_slice %0 {offsets = [3, 0], sizes = [1, 256], strides = [1, 1]} : vector<14x256xf32> to vector<1x256xf32>
    %105 = vector.broadcast %104 : vector<1x256xf32> to vector<8x256xf32>
    %106 = arith.mulf %103, %105 : vector<8x256xf32>
    %c3_i32_12 = arith.constant 3 : i32
    %107 = tpu.dynamic_rotate %96 by %c3_i32_12 dim 1 : vector<8x256xf32>, i32 -> vector<8x256xf32>
    %108 = vector.extract_strided_slice %0 {offsets = [4, 0], sizes = [1, 256], strides = [1, 1]} : vector<14x256xf32> to vector<1x256xf32>
    %109 = vector.broadcast %108 : vector<1x256xf32> to vector<8x256xf32>
    %110 = arith.mulf %107, %109 : vector<8x256xf32>
    %c253_i32_13 = arith.constant 253 : i32
    %111 = tpu.dynamic_rotate %96 by %c253_i32_13 dim 1 : vector<8x256xf32>, i32 -> vector<8x256xf32>
    %112 = vector.extract_strided_slice %0 {offsets = [9, 0], sizes = [1, 256], strides = [1, 1]} : vector<14x256xf32> to vector<1x256xf32>
    %113 = vector.broadcast %112 : vector<1x256xf32> to vector<8x256xf32>
    %114 = arith.mulf %111, %113 : vector<8x256xf32>
    %c250_i32 = arith.constant 250 : i32
    %115 = tpu.dynamic_rotate %96 by %c250_i32 dim 1 : vector<8x256xf32>, i32 -> vector<8x256xf32>
    %116 = vector.extract_strided_slice %0 {offsets = [10, 0], sizes = [1, 256], strides = [1, 1]} : vector<14x256xf32> to vector<1x256xf32>
    %117 = vector.broadcast %116 : vector<1x256xf32> to vector<8x256xf32>
    %118 = arith.mulf %115, %117 : vector<8x256xf32>
    %c247_i32 = arith.constant 247 : i32
    %119 = tpu.dynamic_rotate %96 by %c247_i32 dim 1 : vector<8x256xf32>, i32 -> vector<8x256xf32>
    %120 = vector.extract_strided_slice %0 {offsets = [11, 0], sizes = [1, 256], strides = [1, 1]} : vector<14x256xf32> to vector<1x256xf32>
    %121 = vector.broadcast %120 : vector<1x256xf32> to vector<8x256xf32>
    %122 = arith.mulf %119, %121 : vector<8x256xf32>
    %123 = tpu.concatenate %102, %106, %110, %96, %114, %118, %122 in 0 : vector<8x256xf32>, vector<8x256xf32>, vector<8x256xf32>, vector<8x256xf32>, vector<8x256xf32>, vector<8x256xf32>, vector<8x256xf32> -> vector<56x256xf32>
    %124 = arith.truncf %123 : vector<56x256xf32> to vector<56x256xbf16>
    %cst_14 = arith.constant dense<0.000000e+00> : vector<8x256xf32>
    %125 = tpu.matmul %97, %124, %cst_14 {dimension_numbers = #tpu.dot_dimension_numbers<[1], [0], [0], [1], [0, 0, 1, 1], [], []>} : vector<8x56xbf16>, vector<56x256xbf16>, vector<8x256xf32> -> vector<8x256xf32>
    %126 = vector.broadcast %98 : vector<8x1xf32> to vector<8x256xf32>
    %127 = arith.addf %125, %126 : vector<8x256xf32>
    %128 = vector.extract_strided_slice %2 {offsets = [104, 0], sizes = [8, 1], strides = [1, 1]} : vector<184x1xf32> to vector<8x1xf32>
    %129 = vector.extract_strided_slice %2 {offsets = [112, 0], sizes = [8, 1], strides = [1, 1]} : vector<184x1xf32> to vector<8x1xf32>
    %130 = vector.broadcast %128 : vector<8x1xf32> to vector<8x256xf32>
    %131 = arith.mulf %130, %127 : vector<8x256xf32>
    %132 = math.sin %131 : vector<8x256xf32>
    %133 = vector.broadcast %129 : vector<8x1xf32> to vector<8x256xf32>
    %134 = arith.mulf %133, %132 : vector<8x256xf32>
    %135 = arith.mulf %134, %132 : vector<8x256xf32>
    %136 = arith.addf %127, %135 : vector<8x256xf32>
    %137 = vector.extract_strided_slice %1 {offsets = [0, 640], sizes = [8, 8], strides = [1, 1]} : vector<8x896xbf16> to vector<8x8xbf16>
    %138 = arith.truncf %136 : vector<8x256xf32> to vector<8x256xbf16>
    %cst_15 = arith.constant dense<0.000000e+00> : vector<8x256xf32>
    %139 = tpu.matmul %137, %138, %cst_15 {dimension_numbers = #tpu.dot_dimension_numbers<[1], [0], [0], [1], [0, 0, 1, 1], [], []>} : vector<8x8xbf16>, vector<8x256xbf16>, vector<8x256xf32> -> vector<8x256xf32>
    %140 = vector.extract_strided_slice %2 {offsets = [128, 0], sizes = [8, 1], strides = [1, 1]} : vector<184x1xf32> to vector<8x1xf32>
    %141 = vector.broadcast %140 : vector<8x1xf32> to vector<8x256xf32>
    %142 = arith.addf %139, %141 : vector<8x256xf32>
    %143 = arith.addf %87, %142 : vector<8x256xf32>
    %144 = vector.extract_strided_slice %2 {offsets = [136, 0], sizes = [8, 1], strides = [1, 1]} : vector<184x1xf32> to vector<8x1xf32>
    %145 = vector.extract_strided_slice %2 {offsets = [144, 0], sizes = [8, 1], strides = [1, 1]} : vector<184x1xf32> to vector<8x1xf32>
    %146 = vector.broadcast %144 : vector<8x1xf32> to vector<8x256xf32>
    %147 = arith.mulf %146, %143 : vector<8x256xf32>
    %148 = math.sin %147 : vector<8x256xf32>
    %149 = vector.broadcast %145 : vector<8x1xf32> to vector<8x256xf32>
    %150 = arith.mulf %149, %148 : vector<8x256xf32>
    %151 = arith.mulf %150, %148 : vector<8x256xf32>
    %152 = arith.addf %143, %151 : vector<8x256xf32>
    %153 = vector.extract_strided_slice %1 {offsets = [0, 384], sizes = [8, 56], strides = [1, 1]} : vector<8x896xbf16> to vector<8x56xbf16>
    %154 = vector.extract_strided_slice %2 {offsets = [168, 0], sizes = [8, 1], strides = [1, 1]} : vector<184x1xf32> to vector<8x1xf32>
    %c27_i32 = arith.constant 27 : i32
    %155 = tpu.dynamic_rotate %152 by %c27_i32 dim 1 : vector<8x256xf32>, i32 -> vector<8x256xf32>
    %156 = vector.extract_strided_slice %0 {offsets = [0, 0], sizes = [1, 256], strides = [1, 1]} : vector<14x256xf32> to vector<1x256xf32>
    %157 = vector.broadcast %156 : vector<1x256xf32> to vector<8x256xf32>
    %158 = arith.mulf %155, %157 : vector<8x256xf32>
    %c18_i32 = arith.constant 18 : i32
    %159 = tpu.dynamic_rotate %152 by %c18_i32 dim 1 : vector<8x256xf32>, i32 -> vector<8x256xf32>
    %160 = vector.extract_strided_slice %0 {offsets = [1, 0], sizes = [1, 256], strides = [1, 1]} : vector<14x256xf32> to vector<1x256xf32>
    %161 = vector.broadcast %160 : vector<1x256xf32> to vector<8x256xf32>
    %162 = arith.mulf %159, %161 : vector<8x256xf32>
    %c9_i32_16 = arith.constant 9 : i32
    %163 = tpu.dynamic_rotate %152 by %c9_i32_16 dim 1 : vector<8x256xf32>, i32 -> vector<8x256xf32>
    %164 = vector.extract_strided_slice %0 {offsets = [2, 0], sizes = [1, 256], strides = [1, 1]} : vector<14x256xf32> to vector<1x256xf32>
    %165 = vector.broadcast %164 : vector<1x256xf32> to vector<8x256xf32>
    %166 = arith.mulf %163, %165 : vector<8x256xf32>
    %c247_i32_17 = arith.constant 247 : i32
    %167 = tpu.dynamic_rotate %152 by %c247_i32_17 dim 1 : vector<8x256xf32>, i32 -> vector<8x256xf32>
    %168 = vector.extract_strided_slice %0 {offsets = [11, 0], sizes = [1, 256], strides = [1, 1]} : vector<14x256xf32> to vector<1x256xf32>
    %169 = vector.broadcast %168 : vector<1x256xf32> to vector<8x256xf32>
    %170 = arith.mulf %167, %169 : vector<8x256xf32>
    %c238_i32 = arith.constant 238 : i32
    %171 = tpu.dynamic_rotate %152 by %c238_i32 dim 1 : vector<8x256xf32>, i32 -> vector<8x256xf32>
    %172 = vector.extract_strided_slice %0 {offsets = [12, 0], sizes = [1, 256], strides = [1, 1]} : vector<14x256xf32> to vector<1x256xf32>
    %173 = vector.broadcast %172 : vector<1x256xf32> to vector<8x256xf32>
    %174 = arith.mulf %171, %173 : vector<8x256xf32>
    %c229_i32 = arith.constant 229 : i32
    %175 = tpu.dynamic_rotate %152 by %c229_i32 dim 1 : vector<8x256xf32>, i32 -> vector<8x256xf32>
    %176 = vector.extract_strided_slice %0 {offsets = [13, 0], sizes = [1, 256], strides = [1, 1]} : vector<14x256xf32> to vector<1x256xf32>
    %177 = vector.broadcast %176 : vector<1x256xf32> to vector<8x256xf32>
    %178 = arith.mulf %175, %177 : vector<8x256xf32>
    %179 = tpu.concatenate %158, %162, %166, %152, %170, %174, %178 in 0 : vector<8x256xf32>, vector<8x256xf32>, vector<8x256xf32>, vector<8x256xf32>, vector<8x256xf32>, vector<8x256xf32>, vector<8x256xf32> -> vector<56x256xf32>
    %180 = arith.truncf %179 : vector<56x256xf32> to vector<56x256xbf16>
    %cst_18 = arith.constant dense<0.000000e+00> : vector<8x256xf32>
    %181 = tpu.matmul %153, %180, %cst_18 {dimension_numbers = #tpu.dot_dimension_numbers<[1], [0], [0], [1], [0, 0, 1, 1], [], []>} : vector<8x56xbf16>, vector<56x256xbf16>, vector<8x256xf32> -> vector<8x256xf32>
    %182 = vector.broadcast %154 : vector<8x1xf32> to vector<8x256xf32>
    %183 = arith.addf %181, %182 : vector<8x256xf32>
    %184 = vector.extract_strided_slice %2 {offsets = [152, 0], sizes = [8, 1], strides = [1, 1]} : vector<184x1xf32> to vector<8x1xf32>
    %185 = vector.extract_strided_slice %2 {offsets = [160, 0], sizes = [8, 1], strides = [1, 1]} : vector<184x1xf32> to vector<8x1xf32>
    %186 = vector.broadcast %184 : vector<8x1xf32> to vector<8x256xf32>
    %187 = arith.mulf %186, %183 : vector<8x256xf32>
    %188 = math.sin %187 : vector<8x256xf32>
    %189 = vector.broadcast %185 : vector<8x1xf32> to vector<8x256xf32>
    %190 = arith.mulf %189, %188 : vector<8x256xf32>
    %191 = arith.mulf %190, %188 : vector<8x256xf32>
    %192 = arith.addf %183, %191 : vector<8x256xf32>
    %193 = vector.extract_strided_slice %1 {offsets = [0, 768], sizes = [8, 8], strides = [1, 1]} : vector<8x896xbf16> to vector<8x8xbf16>
    %194 = arith.truncf %192 : vector<8x256xf32> to vector<8x256xbf16>
    %cst_19 = arith.constant dense<0.000000e+00> : vector<8x256xf32>
    %195 = tpu.matmul %193, %194, %cst_19 {dimension_numbers = #tpu.dot_dimension_numbers<[1], [0], [0], [1], [0, 0, 1, 1], [], []>} : vector<8x8xbf16>, vector<8x256xbf16>, vector<8x256xf32> -> vector<8x256xf32>
    %196 = vector.extract_strided_slice %2 {offsets = [176, 0], sizes = [8, 1], strides = [1, 1]} : vector<184x1xf32> to vector<8x1xf32>
    %197 = vector.broadcast %196 : vector<8x1xf32> to vector<8x256xf32>
    %198 = arith.addf %195, %197 : vector<8x256xf32>
    %199 = arith.addf %143, %198 : vector<8x256xf32>
    %c0_20 = arith.constant 0 : index
    %c0_21 = arith.constant 0 : index
    %200 = vector.load %arg4[%c0_20, %c0_21] : memref<8x256xf32, #tpu.memory_space<vmem>>, vector<8x256xf32>
    tpu.vector_store %arg4[%c0_20, %c0_21], %199 {strides = array<i32>} : memref<8x256xf32, #tpu.memory_space<vmem>>, vector<8x256xf32>,
    return
  }
}

</mosaic_0001>

<llo_original>
// kernel: squeeze.5
$region0: #{squeeze.5}
  %s0 = inlined_call_operand.vmem [shape: bf16[1,8,7,8], index: 0, kind: input, shape index: {}]
  %s1 = inlined_call_operand.vmem [shape: bf16[8,56], index: 1, kind: output, shape index: {}]
  $region1: #{squeeze.5} parent=0
    #allocation0 [shape = 'u8[4096]{0}', space=vmem, size = 0x1000, scoped, tag = 'scoped mem for output reshape']
    #allocation1 [shape = 'u8[32768]{0}', space=vmem, size = 0x8000, scoped, tag = 'scoped mem for input reshape']
    %s3 = smul.u32 4, 2
    %s4 = sshllo.u32 0, %s3
    %s5 = smul.addr 4, 7
    %s6 = scalar_lea.vmem %s0, %s5
    %s7 = sshrl.u32 %s4, 1
    %s8 = sor.u32 %s4, %s7
    %s9 = sand.u32 %s8, 85
    %s10 = sshrl.u32 %s9, 1
    %s11 = sor.u32 %s9, %s10
    %s12 = sand.u32 51, %s11
    %s13 = sshrl.u32 %s12, 2
    %s14 = sor.u32 %s12, %s13
    %s15 = sand.u32 15, %s14
    %v16 = vld [vmem:[%s6] sm:%s15]
    %v17 = vunpack.c.l.bf16 %v16
    %v18 = vunpack.c.h.bf16 %v16
    %s19 = scalar_lea.vmem [#allocation1], 56
    %20 = vst [vmem:[%s19] sm:%s4] %v17
    %s21 = smul.addr 4, 6
    %s22 = scalar_lea.vmem %s0, %s21
    %s23 = sshrl.u32 %s4, 1
    %s24 = sor.u32 %s4, %s23
    %s25 = sand.u32 %s24, 85
    %s26 = sshrl.u32 %s25, 1
    %s27 = sor.u32 %s25, %s26
    %s28 = sand.u32 51, %s27
    %s29 = sshrl.u32 %s28, 2
    %s30 = sor.u32 %s28, %s29
    %s31 = sand.u32 15, %s30
    %v32 = vld [vmem:[%s22] sm:%s31]
    %v33 = vunpack.c.l.bf16 %v32
    %v34 = vunpack.c.h.bf16 %v32
    %s35 = scalar_lea.vmem [#allocation1], 48
    %36 = vst [vmem:[%s35] sm:%s4] %v33
    %s37 = smul.addr 4, 5
    %s38 = scalar_lea.vmem %s0, %s37
    %s39 = sshrl.u32 %s4, 1
    %s40 = sor.u32 %s4, %s39
    %s41 = sand.u32 %s40, 85
    %s42 = sshrl.u32 %s41, 1
    %s43 = sor.u32 %s41, %s42
    %s44 = sand.u32 51, %s43
    %s45 = sshrl.u32 %s44, 2
    %s46 = sor.u32 %s44, %s45
    %s47 = sand.u32 15, %s46
    %v48 = vld [vmem:[%s38] sm:%s47]
    %v49 = vunpack.c.l.bf16 %v48
    %v50 = vunpack.c.h.bf16 %v48
    %s51 = scalar_lea.vmem [#allocation1], 40
    %52 = vst [vmem:[%s51] sm:%s4] %v49
    %s53 = smul.addr 4, 4
    %s54 = scalar_lea.vmem %s0, %s53
    %s55 = sshrl.u32 %s4, 1
    %s56 = sor.u32 %s4, %s55
    %s57 = sand.u32 %s56, 85
    %s58 = sshrl.u32 %s57, 1
    %s59 = sor.u32 %s57, %s58
    %s60 = sand.u32 51, %s59
    %s61 = sshrl.u32 %s60, 2
    %s62 = sor.u32 %s60, %s61
    %s63 = sand.u32 15, %s62
    %v64 = vld [vmem:[%s54] sm:%s63]
    %v65 = vunpack.c.l.bf16 %v64
    %v66 = vunpack.c.h.bf16 %v64
    %s67 = scalar_lea.vmem [#allocation1], 32
    %68 = vst [vmem:[%s67] sm:%s4] %v65
    %s69 = smul.addr 4, 3
    %s70 = scalar_lea.vmem %s0, %s69
    %s71 = sshrl.u32 %s4, 1
    %s72 = sor.u32 %s4, %s71
    %s73 = sand.u32 %s72, 85
    %s74 = sshrl.u32 %s73, 1
    %s75 = sor.u32 %s73, %s74
    %s76 = sand.u32 51, %s75
    %s77 = sshrl.u32 %s76, 2
    %s78 = sor.u32 %s76, %s77
    %s79 = sand.u32 15, %s78
    %v80 = vld [vmem:[%s70] sm:%s79]
    %v81 = vunpack.c.l.bf16 %v80
    %v82 = vunpack.c.h.bf16 %v80
    %s83 = scalar_lea.vmem [#allocation1], 24
    %84 = vst [vmem:[%s83] sm:%s4] %v81
    %s85 = smul.addr 4, 2
    %s86 = scalar_lea.vmem %s0, %s85
    %s87 = sshrl.u32 %s4, 1
    %s88 = sor.u32 %s4, %s87
    %s89 = sand.u32 %s88, 85
    %s90 = sshrl.u32 %s89, 1
    %s91 = sor.u32 %s89, %s90
    %s92 = sand.u32 51, %s91
    %s93 = sshrl.u32 %s92, 2
    %s94 = sor.u32 %s92, %s93
    %s95 = sand.u32 15, %s94
    %v96 = vld [vmem:[%s86] sm:%s95]
    %v97 = vunpack.c.l.bf16 %v96
    %v98 = vunpack.c.h.bf16 %v96
    %s99 = scalar_lea.vmem [#allocation1], 16
    %100 = vst [vmem:[%s99] sm:%s4] %v97
    %s101 = scalar_lea.vmem %s0, 4
    %s102 = sshrl.u32 %s4, 1
    %s103 = sor.u32 %s4, %s102
    %s104 = sand.u32 %s103, 85
    %s105 = sshrl.u32 %s104, 1
    %s106 = sor.u32 %s104, %s105
    %s107 = sand.u32 51, %s106
    %s108 = sshrl.u32 %s107, 2
    %s109 = sor.u32 %s107, %s108
    %s110 = sand.u32 15, %s109
    %v111 = vld [vmem:[%s101] sm:%s110]
    %v112 = vunpack.c.l.bf16 %v111
    %v113 = vunpack.c.h.bf16 %v111
    %s114 = scalar_lea.vmem [#allocation1], 8
    %115 = vst [vmem:[%s114] sm:%s4] %v112
    %s116 = sshrl.u32 %s4, 1
    %s117 = sor.u32 %s4, %s116
    %s118 = sand.u32 %s117, 85
    %s119 = sshrl.u32 %s118, 1
    %s120 = sor.u32 %s118, %s119
    %s121 = sand.u32 51, %s120
    %s122 = sshrl.u32 %s121, 2
    %s123 = sor.u32 %s121, %s122
    %s124 = sand.u32 15, %s123
    %v125 = vld [vmem:[%s0] sm:%s124]
    %v126 = vunpack.c.l.bf16 %v125
    %v127 = vunpack.c.h.bf16 %v125
    %128 = vst [vmem:[#allocation1] sm:%s4] %v126
    %v129 = vld [vmem:[#allocation1] ss:$8 sm:$0xf]
    %v130 = vld [vmem:[#allocation1] ss:$8 sm:$0xf0]
    %vm131 = vcmask 1047556
    %v132 = vsel %vm131, %v130, %v129
    %vm133 = vcmask 64512
    %134 = vst.msk [vmem:[#allocation0] sm:$0xff] %vm133, %v132
    %s135 = scalar_lea.vmem [#allocation1], 6
    %v136 = vld [vmem:[%s135] ss:$8 sm:$0xf]
    %s137 = scalar_lea.vmem [#allocation1], 6
    %v138 = vld [vmem:[%s137] ss:$8 sm:$0xf0]
    %vm139 = vcmask 1047556
    %v140 = vsel %vm139, %v138, %v136
    %141 = vrot.lane.b32.xlu0 %v140, 48
    %v142 = vpop.permute.xlu0 %141
    %vm143 = vcmask 458112
    %144 = vst.msk [vmem:[#allocation0] sm:$0xff] %vm143, %v142
    %s145 = scalar_lea.vmem [#allocation1], 5
    %v146 = vld [vmem:[%s145] ss:$8 sm:$0xf]
    %s147 = scalar_lea.vmem [#allocation1], 5
    %v148 = vld [vmem:[%s147] ss:$8 sm:$0xf0]
    %vm149 = vcmask 1047556
    %v150 = vsel %vm149, %v148, %v146
    %151 = vrot.lane.b32.xlu0 %v150, 40
    %v152 = vpop.permute.xlu0 %151
    %vm153 = vcmask 392512
    %154 = vst.msk [vmem:[#allocation0] sm:$0xff] %vm153, %v152
    %s155 = scalar_lea.vmem [#allocation1], 4
    %v156 = vld [vmem:[%s155] ss:$8 sm:$0xf]
    %s157 = scalar_lea.vmem [#allocation1], 4
    %v158 = vld [vmem:[%s157] ss:$8 sm:$0xf0]
    %vm159 = vcmask 1047556
    %v160 = vsel %vm159, %v158, %v156
    %161 = vrot.lane.b32.xlu0 %v160, 32
    %v162 = vpop.permute.xlu0 %161
    %vm163 = vcmask 326912
    %164 = vst.msk [vmem:[#allocation0] sm:$0xff] %vm163, %v162
    %s165 = scalar_lea.vmem [#allocation1], 3
    %v166 = vld [vmem:[%s165] ss:$8 sm:$0xf]
    %s167 = scalar_lea.vmem [#allocation1], 3
    %v168 = vld [vmem:[%s167] ss:$8 sm:$0xf0]
    %vm169 = vcmask 1047556
    %v170 = vsel %vm169, %v168, %v166
    %171 = vrot.lane.b32.xlu0 %v170, 24
    %v172 = vpop.permute.xlu0 %171
    %vm173 = vcmask 261312
    %174 = vst.msk [vmem:[#allocation0] sm:$0xff] %vm173, %v172
    %s175 = scalar_lea.vmem [#allocation1], 2
    %v176 = vld [vmem:[%s175] ss:$8 sm:$0xf]
    %s177 = scalar_lea.vmem [#allocation1], 2
    %v178 = vld [vmem:[%s177] ss:$8 sm:$0xf0]
    %vm179 = vcmask 1047556
    %v180 = vsel %vm179, %v178, %v176
    %181 = vrot.lane.b32.xlu0 %v180, 16
    %v182 = vpop.permute.xlu0 %181
    %vm183 = vcmask 195712
    %184 = vst.msk [vmem:[#allocation0] sm:$0xff] %vm183, %v182
    %s185 = scalar_lea.vmem [#allocation1], 1
    %v186 = vld [vmem:[%s185] ss:$8 sm:$0xf]
    %s187 = scalar_lea.vmem [#allocation1], 1
    %v188 = vld [vmem:[%s187] ss:$8 sm:$0xf0]
    %vm189 = vcmask 1047556
    %v190 = vsel %vm189, %v188, %v186
    %191 = vrot.lane.b32.xlu0 %v190, 8
    %v192 = vpop.permute.xlu0 %191
    %vm193 = vcmask 130112
    %194 = vst.msk [vmem:[#allocation0] sm:$0xff] %vm193, %v192
    %s196 = smul.u32 4, 2
    %s197 = sshllo.u32 0, %s196
    %s198 = sshrl.u32 %s196, 1
    %v199 = vld [vmem:[#allocation0] sm:%s197]
    %v200 = vpack.c.bf16 0.0, %v199
    %s201 = sshllo.u32 0, %s198
    %202 = vst [vmem:[%s1] sm:%s201] %v200

// kernel: decoder_block_forward.1
$region0: #{decoder_block_forward.1}
  #allocation0 [shape = 'u32[]', space=smem, size = 0x4, offset = 0x4, fixed_abs, tag = 'smem constant byte address 0x4 - core index']
  #allocation1 [shape = 'u32[144,128]{1,0:T(1,128)}', space=vmem, size = 0x12000, scoped, tag = 'internal scratch']
  %s0 = inlined_call_operand.vmem [shape: f32[16,256], index: 0, kind: input, shape index: {}]
  %s1 = inlined_call_operand.vmem [shape: f32[14,256], index: 1, kind: input, shape index: {}]
  %s2 = inlined_call_operand.vmem [shape: bf16[8,896], index: 2, kind: input, shape index: {}]
  %s3 = inlined_call_operand.vmem [shape: f32[184,1], index: 3, kind: input, shape index: {}]
  %s4 = inlined_call_operand.hbm [shape: f32[8,256], index: 4, kind: output, shape index: {}]
  %s5 = sld [smem:[#allocation0]]
  $region26: #{decoder_block_forward.1} parent=0
    _
  %s7 = ssub.s32 1, %s5
  %s8 = scalar_select 0, %s7, %s5
  $region1: #{decoder_block_forward.1} parent=0
    #allocation2 [shape = 'u8[8192]{0}', space=vmem, size = 0x2000, scoped, tag = 'output window, operand 0, single buffered']
    #allocation3 [shape = 's32[1]{0}', space=sflag, size = 0x4, scoped, tag = 'scoped memory for decoder_block_forward.1']
    %9 = vsyncpa [#allocation3], 0
    // Predicated region
    $region2: #{decoder_block_forward.1} parent=1 // pred_check
      _
    $region3: #{decoder_block_forward.1} parent=1 // pred_check_branch
      %11 = sbr.rel (0) target = $region5
    $region4: #{decoder_block_forward.1} parent=1 // pred_region
      _
    $region5: #{decoder_block_forward.1} parent=1 // pred_fallthru
      _
    // Predicated region
    $region6: #{decoder_block_forward.1} parent=1 // pred_check
      _
    $region7: #{decoder_block_forward.1} parent=1 // pred_check_branch
      %13 = sbr.rel (0) target = $region9
    $region8: #{decoder_block_forward.1} parent=1 // pred_region
      _
    $region9: #{decoder_block_forward.1} parent=1 // pred_fallthru
      _
    // Predicated region
    $region10: #{decoder_block_forward.1} parent=1 // pred_check
      _
    $region11: #{decoder_block_forward.1} parent=1 // pred_check_branch
      %15 = sbr.rel (0) target = $region13
    $region12: #{decoder_block_forward.1} parent=1 // pred_region
      _
    $region13: #{decoder_block_forward.1} parent=1 // pred_fallthru
      _
    // Predicated region
    $region14: #{decoder_block_forward.1} parent=1 // pred_check
      _
    $region15: #{decoder_block_forward.1} parent=1 // pred_check_branch
      %17 = sbr.rel (0) target = $region17
    $region16: #{decoder_block_forward.1} parent=1 // pred_region
      _
    $region17: #{decoder_block_forward.1} parent=1 // pred_fallthru
      _
    %v19 = vld [vmem:[%s1] sm:$0xff]
    %v20 = vld [vmem:[%s1 + $0x8] sm:$0xff]
    %v21 = vld [vmem:[%s1 + $0x10] sm:$0x3f]
    %v22 = vld [vmem:[%s1 + $0x18] sm:$0x3f]
    %v23 = vld [vmem:[%s2] sm:$0xff]
    %v24 = vld [vmem:[%s2 + $0x8] sm:$0xff]
    %v25 = vld [vmem:[%s2 + $0x10] sm:$0xff]
    %v26 = vld [vmem:[%s2 + $0x18] sm:$0xf]
    %v27 = vld [vmem:[%s3] sm:$0xff]
    %v28 = vld [vmem:[%s3 + $0x8] sm:$0xff]
    %v29 = vld [vmem:[%s3 + $0x10] sm:$0xff]
    %v30 = vld [vmem:[%s3 + $0x18] sm:$0xff]
    %v31 = vld [vmem:[%s3 + $0x20] sm:$0xff]
    %v32 = vld [vmem:[%s3 + $0x28] sm:$0xff]
    %v33 = vld [vmem:[%s3 + $0x30] sm:$0xff]
    %v34 = vld [vmem:[%s3 + $0x38] sm:$0xff]
    %v35 = vld [vmem:[%s3 + $0x40] sm:$0xff]
    %v36 = vld [vmem:[%s3 + $0x48] sm:$0xff]
    %v37 = vld [vmem:[%s3 + $0x50] sm:$0xff]
    %v38 = vld [vmem:[%s3 + $0x58] sm:$0xff]
    %v39 = vld [vmem:[%s3 + $0x60] sm:$0xff]
    %v40 = vld [vmem:[%s3 + $0x68] sm:$0xff]
    %v41 = vld [vmem:[%s3 + $0x70] sm:$0xff]
    %v42 = vld [vmem:[%s3 + $0x78] sm:$0xff]
    %v43 = vld [vmem:[%s3 + $0x80] sm:$0xff]
    %v44 = vld [vmem:[%s3 + $0x88] sm:$0xff]
    %v45 = vld [vmem:[%s3 + $0x90] sm:$0xff]
    %v46 = vld [vmem:[%s3 + $0x98] sm:$0xff]
    %v47 = vld [vmem:[%s3 + $0xa0] sm:$0xff]
    %v48 = vld [vmem:[%s3 + $0xa8] sm:$0xff]
    %v49 = vld [vmem:[%s3 + $0xb0] sm:$0xff]
    %v50 = vld [vmem:[%s0] sm:$0xff]
    %v51 = vld [vmem:[%s0 + $0x8] sm:$0xff]
    %v52 = vld [vmem:[%s0 + $0x10] sm:$0xff]
    %v53 = vld [vmem:[%s0 + $0x18] sm:$0xff]
    %55 = vset.pattern.permute.xlu0 0
    %56 = vperm.xlu0 %55, %v27
    %v57 = vpop.permute.xlu0 %56
    %60 = vset.pattern.permute.xlu0 0
    %61 = vperm.xlu0 %60, %v28
    %v62 = vpop.permute.xlu0 %61
    %v64 = vmul.f32 %v57, %v50
    %v65 = vmul.f32 %v57, %v51
    %v66 = vmul.f32 %v62, %v52
    %v67 = vmul.f32 %v62, %v53
    %v68 = vand.u32 2147483647, %v64
    %vm69 = vcmp.le.f32.partialorder %v68, 0.7853982
    %vm70 = vcmp.lt.s32.totalorder %v64, 0
    %v71 = vand.u32 %v64, 2139095040
    %v72 = vshrl.u32 %v71, 23
    %v73 = vsub.s32 %v72, 127
    %v74 = vand.u32 2147483647, %v64
    %v75 = vand.u32 %v74, 8388607
    %v76 = vor.u32 %v75, 8388608
    %v77 = vsub.s32 0, %v76
    %v78 = vadd.s32 %v73, 1
    %vm79 = vcmp.gt.s32.totalorder %v78, 0
    %v80 = vsel %vm79, %v78, 0
    %v81 = vshrl.u32 %v80, 5
    %v82 = vand.u32 %v80, 31
    %v83 = vsub.s32 32, %v82
    %v84 = vshrl.u32 683565275, %v83
    %v85 = vshll.u32 683565275, %v82
    %v86 = vshrl.u32 2475754826, %v83
    %v87 = vor.u32 %v85, %v86
    %v88 = vshll.u32 2475754826, %v82
    %v89 = vshrl.u32 2131351028, %v83
    %v90 = vor.u32 %v88, %v89
    %v91 = vshll.u32 2131351028, %v82
    %v92 = vshrl.u32 2102212464, %v83
    %v93 = vor.u32 %v91, %v92
    %v94 = vshll.u32 2102212464, %v82
    %v95 = vshrl.u32 920167782, %v83
    %v96 = vor.u32 %v94, %v95
    %v97 = vshll.u32 920167782, %v82
    %v98 = vshrl.u32 1326507024, %v83
    %v99 = vor.u32 %v97, %v98
    %vm100 = vcmp.lt.s32.totalorder %v81, 1
    %vm101 = vcmp.lt.s32.totalorder %v81, 2
    %vm102 = vcmp.lt.s32.totalorder %v81, 3
    %vm103 = vcmp.lt.s32.totalorder %v81, 4
    %v104 = vsel %vm100, %v84, %v87
    %v105 = vsel %vm103, %v93, 2102212464
    %v106 = vsel %vm102, %v90, %v105
    %v107 = vsel %vm101, %v104, %v106
    %v108 = vsel %vm100, %v87, %v90
    %v109 = vsel %vm103, %v96, 920167782
    %v110 = vsel %vm102, %v93, %v109
    %v111 = vsel %vm101, %v108, %v110
    %v112 = vsel %vm100, %v90, %v93
    %v113 = vsel %vm103, %v99, 1326507024
    %v114 = vsel %vm102, %v96, %v113
    %v115 = vsel %vm101, %v112, %v114
    %v116 = vshll.u32 %v76, 8
    %v117 = vmul.u32.u64.compose %v116, %v115
    %v118 = vextract.low.u32 %v117
    %v119 = vextract.high.u32 %v117
    %v120 = vmul.u32.u64.compose %v116, %v111
    %v121 = vextract.low.u32 %v120
    %v122 = vextract.high.u32 %v120
    %v123 = vmul.u32 %v116, %v107
    %v124 = vadd.s32 %v119, %v121
    %vm125 = vc.u32 %v119, %v121
    %v126 = vadd.s32 %v122, 1
    %v127 = vsel %vm125, %v126, %v122
    %v128 = vadd.s32 %v123, %v127
    %v129 = vadd.s32 %v128, 536870912
    %v130 = vshrl.u32 %v129, 30
    %v131 = vshll.u32 %v130, 30
    %v132 = vsub.s32 %v128, %v131
    %vm133 = vcmp.lt.s32.totalorder %v132, 0
    %v134 = vsub.s32 0, %v132
    %v135 = vsel %vm133, %v134, %v132
    %v136 = vclz %v135
    %v137 = vsub.s32 %v136, 2
    %vm138 = vcmp.gt.s32.totalorder 0, %v137
    %v139 = vsel %vm138, 0, %v137
    %v140 = vsub.s32 32, %v139
    %v141 = vshll.u32 %v132, %v139
    %v142 = vshrl.u32 %v124, %v140
    %v143 = vor.u32 %v141, %v142
    %v144 = vsub.s32 4294967266, %v139
    %v145 = vadd.s32 %v144, 127
    %v146 = vshll.u32 %v145, 23
    %v147 = vor.u32 4788187, %v146
    %v148 = vand.u32 2147483647, %v147
    %v150 = vcvt.s32.f32 %v143
    %v151 = vmul.f32 %v150, %v148
    %v152 = vxor.u32 %v151, 2147483648
    %v153 = vsel %vm70, %v152, %v151
    %v154 = vsub.s32 4, %v130
    %v155 = vsel %vm70, %v154, %v130
    %v156 = vsel %vm69, %v64, %v153
    %v157 = vsel %vm69, 0, %v155
    %v158 = vcosq.f32.pop %v156
    %v159 = vsinq.f32.pop %v156
    %vm160 = vweird.f32 %v64
    %v161 = vadd.s32 %v157, 3
    %v162 = vand.u32 %v161, 3
    %vm163 = vcmp.lt.s32.totalorder %v162, 2
    %vm164 = vcmp.eq.s32.totalorder %v162, 0
    %v165 = vxor.u32 %v159, 2147483648
    %v166 = vsel %vm164, %v158, %v165
    %vm167 = vcmp.eq.s32.totalorder %v162, 2
    %v168 = vxor.u32 %v158, 2147483648
    %v169 = vsel %vm167, %v168, %v159
    %v170 = vsel %vm163, %v166, %v169
    %v171 = vsel %vm160, nan, %v170
    %v172 = vand.u32 2147483647, %v65
    %vm173 = vcmp.le.f32.partialorder %v172, 0.7853982
    %vm174 = vcmp.lt.s32.totalorder %v65, 0
    %v175 = vand.u32 %v65, 2139095040
    %v176 = vshrl.u32 %v175, 23
    %v177 = vsub.s32 %v176, 127
    %v178 = vand.u32 2147483647, %v65
    %v179 = vand.u32 %v178, 8388607
    %v180 = vor.u32 %v179, 8388608
    %v181 = vsub.s32 0, %v180
    %v182 = vadd.s32 %v177, 1
    %vm183 = vcmp.gt.s32.totalorder %v182, 0
    %v184 = vsel %vm183, %v182, 0
    %v185 = vshrl.u32 %v184, 5
    %v186 = vand.u32 %v184, 31
    %v187 = vsub.s32 32, %v186
    %v188 = vshrl.u32 683565275, %v187
    %v189 = vshll.u32 683565275, %v186
    %v190 = vshrl.u32 2475754826, %v187
    %v191 = vor.u32 %v189, %v190
    %v192 = vshll.u32 2475754826, %v186
    %v193 = vshrl.u32 2131351028, %v187
    %v194 = vor.u32 %v192, %v193
    %v195 = vshll.u32 2131351028, %v186
    %v196 = vshrl.u32 2102212464, %v187
    %v197 = vor.u32 %v195, %v196
    %v198 = vshll.u32 2102212464, %v186
    %v199 = vshrl.u32 920167782, %v187
    %v200 = vor.u32 %v198, %v199
    %v201 = vshll.u32 920167782, %v186
    %v202 = vshrl.u32 1326507024, %v187
    %v203 = vor.u32 %v201, %v202
    %vm204 = vcmp.lt.s32.totalorder %v185, 1
    %vm205 = vcmp.lt.s32.totalorder %v185, 2
    %vm206 = vcmp.lt.s32.totalorder %v185, 3
    %vm207 = vcmp.lt.s32.totalorder %v185, 4
    %v208 = vsel %vm204, %v188, %v191
    %v209 = vsel %vm207, %v197, 2102212464
    %v210 = vsel %vm206, %v194, %v209
    %v211 = vsel %vm205, %v208, %v210
    %v212 = vsel %vm204, %v191, %v194
    %v213 = vsel %vm207, %v200, 920167782
    %v214 = vsel %vm206, %v197, %v213
    %v215 = vsel %vm205, %v212, %v214
    %v216 = vsel %vm204, %v194, %v197
    %v217 = vsel %vm207, %v203, 1326507024
    %v218 = vsel %vm206, %v200, %v217
    %v219 = vsel %vm205, %v216, %v218
    %v220 = vshll.u32 %v180, 8
    %v221 = vmul.u32.u64.compose %v220, %v219
    %v222 = vextract.low.u32 %v221
    %v223 = vextract.high.u32 %v221
    %v224 = vmul.u32.u64.compose %v220, %v215
    %v225 = vextract.low.u32 %v224
    %v226 = vextract.high.u32 %v224
    %v227 = vmul.u32 %v220, %v211
    %v228 = vadd.s32 %v223, %v225
    %vm229 = vc.u32 %v223, %v225
    %v230 = vadd.s32 %v226, 1
    %v231 = vsel %vm229, %v230, %v226
    %v232 = vadd.s32 %v227, %v231
    %v233 = vadd.s32 %v232, 536870912
    %v234 = vshrl.u32 %v233, 30
    %v235 = vshll.u32 %v234, 30
    %v236 = vsub.s32 %v232, %v235
    %vm237 = vcmp.lt.s32.totalorder %v236, 0
    %v238 = vsub.s32 0, %v236
    %v239 = vsel %vm237, %v238, %v236
    %v240 = vclz %v239
    %v241 = vsub.s32 %v240, 2
    %vm242 = vcmp.gt.s32.totalorder 0, %v241
    %v243 = vsel %vm242, 0, %v241
    %v244 = vsub.s32 32, %v243
    %v245 = vshll.u32 %v236, %v243
    %v246 = vshrl.u32 %v228, %v244
    %v247 = vor.u32 %v245, %v246
    %v248 = vsub.s32 4294967266, %v243
    %v249 = vadd.s32 %v248, 127
    %v250 = vshll.u32 %v249, 23
    %v251 = vor.u32 4788187, %v250
    %v252 = vand.u32 2147483647, %v251
    %v254 = vcvt.s32.f32 %v247
    %v255 = vmul.f32 %v254, %v252
    %v256 = vxor.u32 %v255, 2147483648
    %v257 = vsel %vm174, %v256, %v255
    %v258 = vsub.s32 4, %v234
    %v259 = vsel %vm174, %v258, %v234
    %v260 = vsel %vm173, %v65, %v257
    %v261 = vsel %vm173, 0, %v259
    %v262 = vcosq.f32.pop %v260
    %v263 = vsinq.f32.pop %v260
    %vm264 = vweird.f32 %v65
    %v265 = vadd.s32 %v261, 3
    %v266 = vand.u32 %v265, 3
    %vm267 = vcmp.lt.s32.totalorder %v266, 2
    %vm268 = vcmp.eq.s32.totalorder %v266, 0
    %v269 = vxor.u32 %v263, 2147483648
    %v270 = vsel %vm268, %v262, %v269
    %vm271 = vcmp.eq.s32.totalorder %v266, 2
    %v272 = vxor.u32 %v262, 2147483648
    %v273 = vsel %vm271, %v272, %v263
    %v274 = vsel %vm267, %v270, %v273
    %v275 = vsel %vm264, nan, %v274
    %v276 = vand.u32 2147483647, %v66
    %vm277 = vcmp.le.f32.partialorder %v276, 0.7853982
    %vm278 = vcmp.lt.s32.totalorder %v66, 0
    %v279 = vand.u32 %v66, 2139095040
    %v280 = vshrl.u32 %v279, 23
    %v281 = vsub.s32 %v280, 127
    %v282 = vand.u32 2147483647, %v66
    %v283 = vand.u32 %v282, 8388607
    %v284 = vor.u32 %v283, 8388608
    %v285 = vsub.s32 0, %v284
    %v286 = vadd.s32 %v281, 1
    %vm287 = vcmp.gt.s32.totalorder %v286, 0
    %v288 = vsel %vm287, %v286, 0
    %v289 = vshrl.u32 %v288, 5
    %v290 = vand.u32 %v288, 31
    %v291 = vsub.s32 32, %v290
    %v292 = vshrl.u32 683565275, %v291
    %v293 = vshll.u32 683565275, %v290
    %v294 = vshrl.u32 2475754826, %v291
    %v295 = vor.u32 %v293, %v294
    %v296 = vshll.u32 2475754826, %v290
    %v297 = vshrl.u32 2131351028, %v291
    %v298 = vor.u32 %v296, %v297
    %v299 = vshll.u32 2131351028, %v290
    %v300 = vshrl.u32 2102212464, %v291
    %v301 = vor.u32 %v299, %v300
    %v302 = vshll.u32 2102212464, %v290
    %v303 = vshrl.u32 920167782, %v291
    %v304 = vor.u32 %v302, %v303
    %v305 = vshll.u32 920167782, %v290
    %v306 = vshrl.u32 1326507024, %v291
    %v307 = vor.u32 %v305, %v306
    %vm308 = vcmp.lt.s32.totalorder %v289, 1
    %vm309 = vcmp.lt.s32.totalorder %v289, 2
    %vm310 = vcmp.lt.s32.totalorder %v289, 3
    %vm311 = vcmp.lt.s32.totalorder %v289, 4
    %v312 = vsel %vm308, %v292, %v295
    %v313 = vsel %vm311, %v301, 2102212464
    %v314 = vsel %vm310, %v298, %v313
    %v315 = vsel %vm309, %v312, %v314
    %v316 = vsel %vm308, %v295, %v298
    %v317 = vsel %vm311, %v304, 920167782
    %v318 = vsel %vm310, %v301, %v317
    %v319 = vsel %vm309, %v316, %v318
    %v320 = vsel %vm308, %v298, %v301
    %v321 = vsel %vm311, %v307, 1326507024
    %v322 = vsel %vm310, %v304, %v321
    %v323 = vsel %vm309, %v320, %v322
    %v324 = vshll.u32 %v284, 8
    %v325 = vmul.u32.u64.compose %v324, %v323
    %v326 = vextract.low.u32 %v325
    %v327 = vextract.high.u32 %v325
    %v328 = vmul.u32.u64.compose %v324, %v319
    %v329 = vextract.low.u32 %v328
    %v330 = vextract.high.u32 %v328
    %v331 = vmul.u32 %v324, %v315
    %v332 = vadd.s32 %v327, %v329
    %vm333 = vc.u32 %v327, %v329
    %v334 = vadd.s32 %v330, 1
    %v335 = vsel %vm333, %v334, %v330
    %v336 = vadd.s32 %v331, %v335
    %v337 = vadd.s32 %v336, 536870912
    %v338 = vshrl.u32 %v337, 30
    %v339 = vshll.u32 %v338, 30
    %v340 = vsub.s32 %v336, %v339
    %vm341 = vcmp.lt.s32.totalorder %v340, 0
    %v342 = vsub.s32 0, %v340
    %v343 = vsel %vm341, %v342, %v340
    %v344 = vclz %v343
    %v345 = vsub.s32 %v344, 2
    %vm346 = vcmp.gt.s32.totalorder 0, %v345
    %v347 = vsel %vm346, 0, %v345
    %v348 = vsub.s32 32, %v347
    %v349 = vshll.u32 %v340, %v347
    %v350 = vshrl.u32 %v332, %v348
    %v351 = vor.u32 %v349, %v350
    %v352 = vsub.s32 4294967266, %v347
    %v353 = vadd.s32 %v352, 127
    %v354 = vshll.u32 %v353, 23
    %v355 = vor.u32 4788187, %v354
    %v356 = vand.u32 2147483647, %v355
    %v358 = vcvt.s32.f32 %v351
    %v359 = vmul.f32 %v358, %v356
    %v360 = vxor.u32 %v359, 2147483648
    %v361 = vsel %vm278, %v360, %v359
    %v362 = vsub.s32 4, %v338
    %v363 = vsel %vm278, %v362, %v338
    %v364 = vsel %vm277, %v66, %v361
    %v365 = vsel %vm277, 0, %v363
    %v366 = vcosq.f32.pop %v364
    %v367 = vsinq.f32.pop %v364
    %vm368 = vweird.f32 %v66
    %v369 = vadd.s32 %v365, 3
    %v370 = vand.u32 %v369, 3
    %vm371 = vcmp.lt.s32.totalorder %v370, 2
    %vm372 = vcmp.eq.s32.totalorder %v370, 0
    %v373 = vxor.u32 %v367, 2147483648
    %v374 = vsel %vm372, %v366, %v373
    %vm375 = vcmp.eq.s32.totalorder %v370, 2
    %v376 = vxor.u32 %v366, 2147483648
    %v377 = vsel %vm375, %v376, %v367
    %v378 = vsel %vm371, %v374, %v377
    %v379 = vsel %vm368, nan, %v378
    %v380 = vand.u32 2147483647, %v67
    %vm381 = vcmp.le.f32.partialorder %v380, 0.7853982
    %vm382 = vcmp.lt.s32.totalorder %v67, 0
    %v383 = vand.u32 %v67, 2139095040
    %v384 = vshrl.u32 %v383, 23
    %v385 = vsub.s32 %v384, 127
    %v386 = vand.u32 2147483647, %v67
    %v387 = vand.u32 %v386, 8388607
    %v388 = vor.u32 %v387, 8388608
    %v389 = vsub.s32 0, %v388
    %v390 = vadd.s32 %v385, 1
    %vm391 = vcmp.gt.s32.totalorder %v390, 0
    %v392 = vsel %vm391, %v390, 0
    %v393 = vshrl.u32 %v392, 5
    %v394 = vand.u32 %v392, 31
    %v395 = vsub.s32 32, %v394
    %v396 = vshrl.u32 683565275, %v395
    %v397 = vshll.u32 683565275, %v394
    %v398 = vshrl.u32 2475754826, %v395
    %v399 = vor.u32 %v397, %v398
    %v400 = vshll.u32 2475754826, %v394
    %v401 = vshrl.u32 2131351028, %v395
    %v402 = vor.u32 %v400, %v401
    %v403 = vshll.u32 2131351028, %v394
    %v404 = vshrl.u32 2102212464, %v395
    %v405 = vor.u32 %v403, %v404
    %v406 = vshll.u32 2102212464, %v394
    %v407 = vshrl.u32 920167782, %v395
    %v408 = vor.u32 %v406, %v407
    %v409 = vshll.u32 920167782, %v394
    %v410 = vshrl.u32 1326507024, %v395
    %v411 = vor.u32 %v409, %v410
    %vm412 = vcmp.lt.s32.totalorder %v393, 1
    %vm413 = vcmp.lt.s32.totalorder %v393, 2
    %vm414 = vcmp.lt.s32.totalorder %v393, 3
    %vm415 = vcmp.lt.s32.totalorder %v393, 4
    %v416 = vsel %vm412, %v396, %v399
    %v417 = vsel %vm415, %v405, 2102212464
    %v418 = vsel %vm414, %v402, %v417
    %v419 = vsel %vm413, %v416, %v418
    %v420 = vsel %vm412, %v399, %v402
    %v421 = vsel %vm415, %v408, 920167782
    %v422 = vsel %vm414, %v405, %v421
    %v423 = vsel %vm413, %v420, %v422
    %v424 = vsel %vm412, %v402, %v405
    %v425 = vsel %vm415, %v411, 1326507024
    %v426 = vsel %vm414, %v408, %v425
    %v427 = vsel %vm413, %v424, %v426
    %v428 = vshll.u32 %v388, 8
    %v429 = vmul.u32.u64.compose %v428, %v427
    %v430 = vextract.low.u32 %v429
    %v431 = vextract.high.u32 %v429
    %v432 = vmul.u32.u64.compose %v428, %v423
    %v433 = vextract.low.u32 %v432
    %v434 = vextract.high.u32 %v432
    %v435 = vmul.u32 %v428, %v419
    %v436 = vadd.s32 %v431, %v433
    %vm437 = vc.u32 %v431, %v433
    %v438 = vadd.s32 %v434, 1
    %v439 = vsel %vm437, %v438, %v434
    %v440 = vadd.s32 %v435, %v439
    %v441 = vadd.s32 %v440, 536870912
    %v442 = vshrl.u32 %v441, 30
    %v443 = vshll.u32 %v442, 30
    %v444 = vsub.s32 %v440, %v443
    %vm445 = vcmp.lt.s32.totalorder %v444, 0
    %v446 = vsub.s32 0, %v444
    %v447 = vsel %vm445, %v446, %v444
    %v448 = vclz %v447
    %v449 = vsub.s32 %v448, 2
    %vm450 = vcmp.gt.s32.totalorder 0, %v449
    %v451 = vsel %vm450, 0, %v449
    %v452 = vsub.s32 32, %v451
    %v453 = vshll.u32 %v444, %v451
    %v454 = vshrl.u32 %v436, %v452
    %v455 = vor.u32 %v453, %v454
    %v456 = vsub.s32 4294967266, %v451
    %v457 = vadd.s32 %v456, 127
    %v458 = vshll.u32 %v457, 23
    %v459 = vor.u32 4788187, %v458
    %v460 = vand.u32 2147483647, %v459
    %v462 = vcvt.s32.f32 %v455
    %v463 = vmul.f32 %v462, %v460
    %v464 = vxor.u32 %v463, 2147483648
    %v465 = vsel %vm382, %v464, %v463
    %v466 = vsub.s32 4, %v442
    %v467 = vsel %vm382, %v466, %v442
    %v468 = vsel %vm381, %v67, %v465
    %v469 = vsel %vm381, 0, %v467
    %v470 = vcosq.f32.pop %v468
    %v471 = vsinq.f32.pop %v468
    %vm472 = vweird.f32 %v67
    %v473 = vadd.s32 %v469, 3
    %v474 = vand.u32 %v473, 3
    %vm475 = vcmp.lt.s32.totalorder %v474, 2
    %vm476 = vcmp.eq.s32.totalorder %v474, 0
    %v477 = vxor.u32 %v471, 2147483648
    %v478 = vsel %vm476, %v470, %v477
    %vm479 = vcmp.eq.s32.totalorder %v474, 2
    %v480 = vxor.u32 %v470, 2147483648
    %v481 = vsel %vm479, %v480, %v471
    %v482 = vsel %vm475, %v478, %v481
    %v483 = vsel %vm472, nan, %v482
    %485 = vset.pattern.permute.xlu0 0
    %486 = vperm.xlu0 %485, %v29
    %v487 = vpop.permute.xlu0 %486
    %490 = vset.pattern.permute.xlu0 0
    %491 = vperm.xlu0 %490, %v30
    %v492 = vpop.permute.xlu0 %491
    %v494 = vmul.f32 %v487, %v171
    %v495 = vmul.f32 %v487, %v275
    %v496 = vmul.f32 %v492, %v379
    %v497 = vmul.f32 %v492, %v483
    %v498 = vmul.f32 %v494, %v171
    %v499 = vmul.f32 %v495, %v275
    %v500 = vmul.f32 %v496, %v379
    %v501 = vmul.f32 %v497, %v483
    %v502 = vadd.f32 %v50, %v498
    %v503 = vadd.f32 %v51, %v499
    %v504 = vadd.f32 %v52, %v500
    %v505 = vadd.f32 %v53, %v501
    %506 = vrot.lane.b32.xlu0 %v502, 127
    %v507 = vpop.permute.xlu0 %506
    %508 = vrot.lane.b32.xlu0 %v504, 127
    %v509 = vpop.permute.xlu0 %508
    %510 = vrot.lane.b32.xlu0 %v503, 127
    %v511 = vpop.permute.xlu0 %510
    %512 = vrot.lane.b32.xlu0 %v505, 127
    %v513 = vpop.permute.xlu0 %512
    %v514 = vlaneseq
    %v515 = vand.u32 %v514, 127
    %vm516 = vcmp.lt.s32.totalorder %v515, 127
    %v517 = vsel %vm516, %v507, %v511
    %v518 = vsel %vm516, %v509, %v513
    %v519 = vsel %vm516, %v511, %v507
    %v520 = vsel %vm516, %v513, %v509
    %v521 = vlaneseq
    %v522 = vshrl.u32 %v521, 7
    %v523 = vsub.s32 7, %v522
    %v524 = vrot.slane %v19, %v523
    %v525 = vlaneseq
    %v526 = vshrl.u32 %v525, 7
    %v527 = vsub.s32 7, %v526
    %v528 = vrot.slane %v20, %v527
    %v529 = vmul.f32 %v517, %v524
    %v530 = vmul.f32 %v519, %v528
    %v531 = vmul.f32 %v518, %v524
    %v532 = vmul.f32 %v520, %v528
    %533 = vrot.lane.b32.xlu0 %v502, 1
    %v534 = vpop.permute.xlu0 %533
    %535 = vrot.lane.b32.xlu0 %v504, 1
    %v536 = vpop.permute.xlu0 %535
    %537 = vrot.lane.b32.xlu0 %v503, 1
    %v538 = vpop.permute.xlu0 %537
    %539 = vrot.lane.b32.xlu0 %v505, 1
    %v540 = vpop.permute.xlu0 %539
    %vm541 = vcmp.lt.s32.totalorder %v515, 1
    %v542 = vsel %vm541, %v534, %v538
    %v543 = vsel %vm541, %v536, %v540
    %v544 = vsel %vm541, %v538, %v534
    %v545 = vsel %vm541, %v540, %v536
    %v546 = vlaneseq
    %v547 = vshrl.u32 %v546, 7
    %v548 = vsub.s32 6, %v547
    %v549 = vrot.slane %v19, %v548
    %v550 = vlaneseq
    %v551 = vshrl.u32 %v550, 7
    %v552 = vsub.s32 6, %v551
    %v553 = vrot.slane %v20, %v552
    %v554 = vmul.f32 %v544, %v549
    %v555 = vmul.f32 %v542, %v553
    %v556 = vmul.f32 %v545, %v549
    %v557 = vmul.f32 %v543, %v553
    %558 = vrot.lane.b32.xlu0 %v502, 2
    %v559 = vpop.permute.xlu0 %558
    %560 = vrot.lane.b32.xlu0 %v504, 2
    %v561 = vpop.permute.xlu0 %560
    %562 = vrot.lane.b32.xlu0 %v503, 2
    %v563 = vpop.permute.xlu0 %562
    %564 = vrot.lane.b32.xlu0 %v505, 2
    %v565 = vpop.permute.xlu0 %564
    %vm566 = vcmp.lt.s32.totalorder %v515, 2
    %v567 = vsel %vm566, %v559, %v563
    %v568 = vsel %vm566, %v561, %v565
    %v569 = vsel %vm566, %v563, %v559
    %v570 = vsel %vm566, %v565, %v561
    %v571 = vlaneseq
    %v572 = vshrl.u32 %v571, 7
    %v573 = vsub.s32 5, %v572
    %v574 = vrot.slane %v19, %v573
    %v575 = vlaneseq
    %v576 = vshrl.u32 %v575, 7
    %v577 = vsub.s32 5, %v576
    %v578 = vrot.slane %v20, %v577
    %v579 = vmul.f32 %v569, %v574
    %v580 = vmul.f32 %v567, %v578
    %v581 = vmul.f32 %v570, %v574
    %v582 = vmul.f32 %v568, %v578
    %v583 = vpack.c.bf16 %v531, %v529
    %v584 = vpack.c.bf16 %v532, %v530
    %v585 = vpack.c.bf16 %v504, %v502
    %v586 = vpack.c.bf16 %v505, %v503
    %v587 = vpack.c.bf16 %v556, %v554
    %v588 = vpack.c.bf16 %v557, %v555
    %v589 = vpack.c.bf16 %v581, %v579
    %v590 = vpack.c.bf16 %v582, %v580
    %592 = vset.pattern.permute.xlu0 0
    %593 = vperm.xlu0 %592, %v31
    %v594 = vpop.permute.xlu0 %593
    %vm596 = vcmask 523264
    %v598 = vsel %vm596, %v23, 0
    %600 = vmatprep.subr.bf16.mxu0 %v584
    %601 = vmatpush1.bf16.msra.mxu0 %v583
    %602 = vmatprep.subr.bf16.mxu0 %v586
    %603 = vmatpush1.bf16.msra.mxu0 %v585
    %604 = vmatprep.subr.bf16.mxu0 %v588
    %605 = vmatpush1.bf16.msra.mxu0 %v587
    %606 = vmatprep.subr.bf16.mxu0 %v590
    %607 = vmatpush1.bf16.msra.mxu0 %v589
    %608 = vmatprep.subr.bf16.mxu0 0
    %609 = vmatpush1.bf16.msra.mxu0 0
    %610 = vmatprep.subr.bf16.mxu0 0
    %611 = vmatpush1.bf16.msra.mxu0 0
    %612 = vmatprep.subr.bf16.mxu0 0
    %613 = vmatpush1.bf16.msra.mxu0 0
    %614 = vmatprep.subr.bf16.mxu0 0
    %615 = vmatpush1.bf16.msra.mxu0 0
    %616 = vmatprep.subr.bf16.mxu0 0
    %617 = vmatpush1.bf16.msra.mxu0 0
    %618 = vmatprep.subr.bf16.mxu0 0
    %619 = vmatpush1.bf16.msra.mxu0 0
    %620 = vmatprep.subr.bf16.mxu0 0
    %621 = vmatpush1.bf16.msra.mxu0 0
    %622 = vmatprep.subr.bf16.mxu0 0
    %623 = vmatpush1.bf16.msra.mxu0 0
    %624 = vmatprep.subr.bf16.mxu0 0
    %625 = vmatpush1.bf16.msra.mxu0 0
    %626 = vmatprep.subr.bf16.mxu0 0
    %627 = vmatpush1.bf16.msra.mxu0 0
    %628 = vmatprep.subr.bf16.mxu0 0
    %629 = vmatpush1.bf16.msra.mxu0 0
    %630 = vmatprep.subr.bf16.mxu0 0
    %631 = vmatpush1.bf16.msra.mxu0 0
    %632 = vmatprep.mubr.bf16.mxu0 0
    %633 = vmatmul.mubr.bf16.gmra.mrb[0].mxu0 %v598
    %v634 = vpop.f32.mrb[0].mxu0
    %v635 = vadd.f32 %v594, %v634
    %v636 = vpop.f32.mrb[0].mxu0
    %v637 = vadd.f32 %v594, %v636
    %v638 = vpop.f32.mrb[0].mxu0
    %v639 = vpop.f32.mrb[0].mxu0
    %640 = vdwg.mxu0
    %642 = vset.pattern.permute.xlu0 0
    %643 = vperm.xlu0 %642, %v32
    %v644 = vpop.permute.xlu0 %643
    %v646 = vmul.f32 %v644, %v635
    %v647 = vmul.f32 %v644, %v637
    %v648 = vand.u32 2147483647, %v646
    %vm649 = vcmp.le.f32.partialorder %v648, 0.7853982
    %vm650 = vcmp.lt.s32.totalorder %v646, 0
    %v651 = vand.u32 %v646, 2139095040
    %v652 = vshrl.u32 %v651, 23
    %v653 = vsub.s32 %v652, 127
    %v654 = vand.u32 2147483647, %v646
    %v655 = vand.u32 %v654, 8388607
    %v656 = vor.u32 %v655, 8388608
    %v657 = vsub.s32 0, %v656
    %v658 = vadd.s32 %v653, 1
    %vm659 = vcmp.gt.s32.totalorder %v658, 0
    %v660 = vsel %vm659, %v658, 0
    %v661 = vshrl.u32 %v660, 5
    %v662 = vand.u32 %v660, 31
    %v663 = vsub.s32 32, %v662
    %v664 = vshrl.u32 683565275, %v663
    %v665 = vshll.u32 683565275, %v662
    %v666 = vshrl.u32 2475754826, %v663
    %v667 = vor.u32 %v665, %v666
    %v668 = vshll.u32 2475754826, %v662
    %v669 = vshrl.u32 2131351028, %v663
    %v670 = vor.u32 %v668, %v669
    %v671 = vshll.u32 2131351028, %v662
    %v672 = vshrl.u32 2102212464, %v663
    %v673 = vor.u32 %v671, %v672
    %v674 = vshll.u32 2102212464, %v662
    %v675 = vshrl.u32 920167782, %v663
    %v676 = vor.u32 %v674, %v675
    %v677 = vshll.u32 920167782, %v662
    %v678 = vshrl.u32 1326507024, %v663
    %v679 = vor.u32 %v677, %v678
    %vm680 = vcmp.lt.s32.totalorder %v661, 1
    %vm681 = vcmp.lt.s32.totalorder %v661, 2
    %vm682 = vcmp.lt.s32.totalorder %v661, 3
    %vm683 = vcmp.lt.s32.totalorder %v661, 4
    %v684 = vsel %vm680, %v664, %v667
    %v685 = vsel %vm683, %v673, 2102212464
    %v686 = vsel %vm682, %v670, %v685
    %v687 = vsel %vm681, %v684, %v686
    %v688 = vsel %vm680, %v667, %v670
    %v689 = vsel %vm683, %v676, 920167782
    %v690 = vsel %vm682, %v673, %v689
    %v691 = vsel %vm681, %v688, %v690
    %v692 = vsel %vm680, %v670, %v673
    %v693 = vsel %vm683, %v679, 1326507024
    %v694 = vsel %vm682, %v676, %v693
    %v695 = vsel %vm681, %v692, %v694
    %v696 = vshll.u32 %v656, 8
    %v697 = vmul.u32.u64.compose %v696, %v695
    %v698 = vextract.low.u32 %v697
    %v699 = vextract.high.u32 %v697
    %v700 = vmul.u32.u64.compose %v696, %v691
    %v701 = vextract.low.u32 %v700
    %v702 = vextract.high.u32 %v700
    %v703 = vmul.u32 %v696, %v687
    %v704 = vadd.s32 %v699, %v701
    %vm705 = vc.u32 %v699, %v701
    %v706 = vadd.s32 %v702, 1
    %v707 = vsel %vm705, %v706, %v702
    %v708 = vadd.s32 %v703, %v707
    %v709 = vadd.s32 %v708, 536870912
    %v710 = vshrl.u32 %v709, 30
    %v711 = vshll.u32 %v710, 30
    %v712 = vsub.s32 %v708, %v711
    %vm713 = vcmp.lt.s32.totalorder %v712, 0
    %v714 = vsub.s32 0, %v712
    %v715 = vsel %vm713, %v714, %v712
    %v716 = vclz %v715
    %v717 = vsub.s32 %v716, 2
    %vm718 = vcmp.gt.s32.totalorder 0, %v717
    %v719 = vsel %vm718, 0, %v717
    %v720 = vsub.s32 32, %v719
    %v721 = vshll.u32 %v712, %v719
    %v722 = vshrl.u32 %v704, %v720
    %v723 = vor.u32 %v721, %v722
    %v724 = vsub.s32 4294967266, %v719
    %v725 = vadd.s32 %v724, 127
    %v726 = vshll.u32 %v725, 23
    %v727 = vor.u32 4788187, %v726
    %v728 = vand.u32 2147483647, %v727
    %v730 = vcvt.s32.f32 %v723
    %v731 = vmul.f32 %v730, %v728
    %v732 = vxor.u32 %v731, 2147483648
    %v733 = vsel %vm650, %v732, %v731
    %v734 = vsub.s32 4, %v710
    %v735 = vsel %vm650, %v734, %v710
    %v736 = vsel %vm649, %v646, %v733
    %v737 = vsel %vm649, 0, %v735
    %v738 = vcosq.f32.pop %v736
    %v739 = vsinq.f32.pop %v736
    %vm740 = vweird.f32 %v646
    %v741 = vadd.s32 %v737, 3
    %v742 = vand.u32 %v741, 3
    %vm743 = vcmp.lt.s32.totalorder %v742, 2
    %vm744 = vcmp.eq.s32.totalorder %v742, 0
    %v745 = vxor.u32 %v739, 2147483648
    %v746 = vsel %vm744, %v738, %v745
    %vm747 = vcmp.eq.s32.totalorder %v742, 2
    %v748 = vxor.u32 %v738, 2147483648
    %v749 = vsel %vm747, %v748, %v739
    %v750 = vsel %vm743, %v746, %v749
    %v751 = vsel %vm740, nan, %v750
    %v752 = vand.u32 2147483647, %v647
    %vm753 = vcmp.le.f32.partialorder %v752, 0.7853982
    %vm754 = vcmp.lt.s32.totalorder %v647, 0
    %v755 = vand.u32 %v647, 2139095040
    %v756 = vshrl.u32 %v755, 23
    %v757 = vsub.s32 %v756, 127
    %v758 = vand.u32 2147483647, %v647
    %v759 = vand.u32 %v758, 8388607
    %v760 = vor.u32 %v759, 8388608
    %v761 = vsub.s32 0, %v760
    %v762 = vadd.s32 %v757, 1
    %vm763 = vcmp.gt.s32.totalorder %v762, 0
    %v764 = vsel %vm763, %v762, 0
    %v765 = vshrl.u32 %v764, 5
    %v766 = vand.u32 %v764, 31
    %v767 = vsub.s32 32, %v766
    %v768 = vshrl.u32 683565275, %v767
    %v769 = vshll.u32 683565275, %v766
    %v770 = vshrl.u32 2475754826, %v767
    %v771 = vor.u32 %v769, %v770
    %v772 = vshll.u32 2475754826, %v766
    %v773 = vshrl.u32 2131351028, %v767
    %v774 = vor.u32 %v772, %v773
    %v775 = vshll.u32 2131351028, %v766
    %v776 = vshrl.u32 2102212464, %v767
    %v777 = vor.u32 %v775, %v776
    %v778 = vshll.u32 2102212464, %v766
    %v779 = vshrl.u32 920167782, %v767
    %v780 = vor.u32 %v778, %v779
    %v781 = vshll.u32 920167782, %v766
    %v782 = vshrl.u32 1326507024, %v767
    %v783 = vor.u32 %v781, %v782
    %vm784 = vcmp.lt.s32.totalorder %v765, 1
    %vm785 = vcmp.lt.s32.totalorder %v765, 2
    %vm786 = vcmp.lt.s32.totalorder %v765, 3
    %vm787 = vcmp.lt.s32.totalorder %v765, 4
    %v788 = vsel %vm784, %v768, %v771
    %v789 = vsel %vm787, %v777, 2102212464
    %v790 = vsel %vm786, %v774, %v789
    %v791 = vsel %vm785, %v788, %v790
    %v792 = vsel %vm784, %v771, %v774
    %v793 = vsel %vm787, %v780, 920167782
    %v794 = vsel %vm786, %v777, %v793
    %v795 = vsel %vm785, %v792, %v794
    %v796 = vsel %vm784, %v774, %v777
    %v797 = vsel %vm787, %v783, 1326507024
    %v798 = vsel %vm786, %v780, %v797
    %v799 = vsel %vm785, %v796, %v798
    %v800 = vshll.u32 %v760, 8
    %v801 = vmul.u32.u64.compose %v800, %v799
    %v802 = vextract.low.u32 %v801
    %v803 = vextract.high.u32 %v801
    %v804 = vmul.u32.u64.compose %v800, %v795
    %v805 = vextract.low.u32 %v804
    %v806 = vextract.high.u32 %v804
    %v807 = vmul.u32 %v800, %v791
    %v808 = vadd.s32 %v803, %v805
    %vm809 = vc.u32 %v803, %v805
    %v810 = vadd.s32 %v806, 1
    %v811 = vsel %vm809, %v810, %v806
    %v812 = vadd.s32 %v807, %v811
    %v813 = vadd.s32 %v812, 536870912
    %v814 = vshrl.u32 %v813, 30
    %v815 = vshll.u32 %v814, 30
    %v816 = vsub.s32 %v812, %v815
    %vm817 = vcmp.lt.s32.totalorder %v816, 0
    %v818 = vsub.s32 0, %v816
    %v819 = vsel %vm817, %v818, %v816
    %v820 = vclz %v819
    %v821 = vsub.s32 %v820, 2
    %vm822 = vcmp.gt.s32.totalorder 0, %v821
    %v823 = vsel %vm822, 0, %v821
    %v824 = vsub.s32 32, %v823
    %v825 = vshll.u32 %v816, %v823
    %v826 = vshrl.u32 %v808, %v824
    %v827 = vor.u32 %v825, %v826
    %v828 = vsub.s32 4294967266, %v823
    %v829 = vadd.s32 %v828, 127
    %v830 = vshll.u32 %v829, 23
    %v831 = vor.u32 4788187, %v830
    %v832 = vand.u32 2147483647, %v831
    %v834 = vcvt.s32.f32 %v827
    %v835 = vmul.f32 %v834, %v832
    %v836 = vxor.u32 %v835, 2147483648
    %v837 = vsel %vm754, %v836, %v835
    %v838 = vsub.s32 4, %v814
    %v839 = vsel %vm754, %v838, %v814
    %v840 = vsel %vm753, %v647, %v837
    %v841 = vsel %vm753, 0, %v839
    %v842 = vcosq.f32.pop %v840
    %v843 = vsinq.f32.pop %v840
    %vm844 = vweird.f32 %v647
    %v845 = vadd.s32 %v841, 3
    %v846 = vand.u32 %v845, 3
    %vm847 = vcmp.lt.s32.totalorder %v846, 2
    %vm848 = vcmp.eq.s32.totalorder %v846, 0
    %v849 = vxor.u32 %v843, 2147483648
    %v850 = vsel %vm848, %v842, %v849
    %vm851 = vcmp.eq.s32.totalorder %v846, 2
    %v852 = vxor.u32 %v842, 2147483648
    %v853 = vsel %vm851, %v852, %v843
    %v854 = vsel %vm847, %v850, %v853
    %v855 = vsel %vm844, nan, %v854
    %857 = vset.pattern.permute.xlu0 0
    %858 = vperm.xlu0 %857, %v33
    %v859 = vpop.permute.xlu0 %858
    %v861 = vmul.f32 %v859, %v751
    %v862 = vmul.f32 %v859, %v855
    %v863 = vmul.f32 %v861, %v751
    %v864 = vmul.f32 %v862, %v855
    %v865 = vadd.f32 %v635, %v863
    %v866 = vadd.f32 %v637, %v864
    %867 = vrot.lane.b32.xlu0 %v865, 3
    %v868 = vpop.permute.xlu0 %867
    %869 = vrot.lane.b32.xlu0 %v866, 3
    %v870 = vpop.permute.xlu0 %869
    %vm871 = vcmp.lt.s32.totalorder %v515, 3
    %v872 = vsel %vm871, %v868, %v870
    %v873 = vsel %vm871, %v870, %v868
    %v874 = vlaneseq
    %v875 = vshrl.u32 %v874, 7
    %v876 = vsub.s32 4, %v875
    %v877 = vrot.slane %v19, %v876
    %v878 = vlaneseq
    %v879 = vshrl.u32 %v878, 7
    %v880 = vsub.s32 4, %v879
    %v881 = vrot.slane %v20, %v880
    %v882 = vmul.f32 %v873, %v877
    %v883 = vmul.f32 %v872, %v881
    %884 = vrot.lane.b32.xlu0 %v865, 2
    %v885 = vpop.permute.xlu0 %884
    %886 = vrot.lane.b32.xlu0 %v866, 2
    %v887 = vpop.permute.xlu0 %886
    %v888 = vsel %vm566, %v885, %v887
    %v889 = vsel %vm566, %v887, %v885
    %v890 = vmul.f32 %v889, %v574
    %v891 = vmul.f32 %v888, %v578
    %892 = vrot.lane.b32.xlu0 %v865, 1
    %v893 = vpop.permute.xlu0 %892
    %894 = vrot.lane.b32.xlu0 %v866, 1
    %v895 = vpop.permute.xlu0 %894
    %v896 = vsel %vm541, %v893, %v895
    %v897 = vsel %vm541, %v895, %v893
    %v898 = vmul.f32 %v897, %v549
    %v899 = vmul.f32 %v896, %v553
    %900 = vrot.lane.b32.xlu0 %v865, 127
    %v901 = vpop.permute.xlu0 %900
    %902 = vrot.lane.b32.xlu0 %v866, 127
    %v903 = vpop.permute.xlu0 %902
    %v904 = vsel %vm516, %v901, %v903
    %v905 = vsel %vm516, %v903, %v901
    %v906 = vmul.f32 %v904, %v524
    %v907 = vmul.f32 %v905, %v528
    %908 = vrot.lane.b32.xlu0 %v865, 126
    %v909 = vpop.permute.xlu0 %908
    %910 = vrot.lane.b32.xlu0 %v866, 126
    %v911 = vpop.permute.xlu0 %910
    %vm912 = vcmp.lt.s32.totalorder %v515, 126
    %v913 = vsel %vm912, %v909, %v911
    %v914 = vsel %vm912, %v911, %v909
    %v915 = vlaneseq
    %v916 = vshrl.u32 %v915, 7
    %v917 = vsub.s32 0, %v916
    %v918 = vrot.slane %v21, %v917
    %v919 = vlaneseq
    %v920 = vshrl.u32 %v919, 7
    %v921 = vsub.s32 0, %v920
    %v922 = vrot.slane %v22, %v921
    %v923 = vmul.f32 %v913, %v918
    %v924 = vmul.f32 %v914, %v922
    %925 = vrot.lane.b32.xlu0 %v865, 125
    %v926 = vpop.permute.xlu0 %925
    %927 = vrot.lane.b32.xlu0 %v866, 125
    %v928 = vpop.permute.xlu0 %927
    %vm929 = vcmp.lt.s32.totalorder %v515, 125
    %v930 = vsel %vm929, %v926, %v928
    %v931 = vsel %vm929, %v928, %v926
    %v932 = vlaneseq
    %v933 = vshrl.u32 %v932, 7
    %v934 = vsub.s32 1, %v933
    %v935 = vrot.slane %v21, %v934
    %v936 = vlaneseq
    %v937 = vshrl.u32 %v936, 7
    %v938 = vsub.s32 1, %v937
    %v939 = vrot.slane %v22, %v938
    %v940 = vmul.f32 %v930, %v935
    %v941 = vmul.f32 %v931, %v939
    %v942 = vpack.c.bf16 %v890, %v882
    %v943 = vpack.c.bf16 %v891, %v883
    %v944 = vpack.c.bf16 %v865, %v898
    %v945 = vpack.c.bf16 %v866, %v899
    %v946 = vpack.c.bf16 %v923, %v906
    %v947 = vpack.c.bf16 %v924, %v907
    %v948 = vpack.c.bf16 %v940, %v940
    %v949 = vpack.c.bf16 %v941, %v941
    %951 = vset.pattern.permute.xlu0 0
    %952 = vperm.xlu0 %951, %v36
    %v953 = vpop.permute.xlu0 %952
    %v956 = vunpack.c.h.b16 %v23
    %v957 = vpack.c.b16 %v956, %v956
    %vm958 = vcmask 457728
    %v960 = vsel %vm958, %v957, 0
    %vm962 = vcmask 1043456
    %v964 = vsel %vm962, %v948, 0
    %v967 = vsel %vm962, %v949, 0
    %969 = vmatprep.subr.bf16.mxu0 %v943
    %970 = vmatpush1.bf16.msra.mxu0 %v942
    %971 = vmatprep.subr.bf16.mxu0 %v945
    %972 = vmatpush1.bf16.msra.mxu0 %v944
    %973 = vmatprep.subr.bf16.mxu0 %v947
    %974 = vmatpush1.bf16.msra.mxu0 %v946
    %975 = vmatprep.subr.bf16.mxu0 %v967
    %976 = vmatpush1.bf16.msra.mxu0 %v964
    %977 = vmatprep.subr.bf16.mxu0 0
    %978 = vmatpush1.bf16.msra.mxu0 0
    %979 = vmatprep.subr.bf16.mxu0 0
    %980 = vmatpush1.bf16.msra.mxu0 0
    %981 = vmatprep.subr.bf16.mxu0 0
    %982 = vmatpush1.bf16.msra.mxu0 0
    %983 = vmatprep.subr.bf16.mxu0 0
    %984 = vmatpush1.bf16.msra.mxu0 0
    %985 = vmatprep.subr.bf16.mxu0 0
    %986 = vmatpush1.bf16.msra.mxu0 0
    %987 = vmatprep.subr.bf16.mxu0 0
    %988 = vmatpush1.bf16.msra.mxu0 0
    %989 = vmatprep.subr.bf16.mxu0 0
    %990 = vmatpush1.bf16.msra.mxu0 0
    %991 = vmatprep.subr.bf16.mxu0 0
    %992 = vmatpush1.bf16.msra.mxu0 0
    %993 = vmatprep.subr.bf16.mxu0 0
    %994 = vmatpush1.bf16.msra.mxu0 0
    %995 = vmatprep.subr.bf16.mxu0 0
    %996 = vmatpush1.bf16.msra.mxu0 0
    %997 = vmatprep.subr.bf16.mxu0 0
    %998 = vmatpush1.bf16.msra.mxu0 0
    %999 = vmatprep.subr.bf16.mxu0 0
    %1000 = vmatpush1.bf16.msra.mxu0 0
    %1001 = vmatprep.mubr.bf16.mxu0 0
    %1002 = vmatmul.mubr.bf16.gmra.mrb[0].mxu0 %v960
    %v1003 = vpop.f32.mrb[0].mxu0
    %v1004 = vadd.f32 %v953, %v1003
    %v1005 = vpop.f32.mrb[0].mxu0
    %v1006 = vadd.f32 %v953, %v1005
    %v1007 = vpop.f32.mrb[0].mxu0
    %v1008 = vpop.f32.mrb[0].mxu0
    %1009 = vdwg.mxu0
    %1011 = vset.pattern.permute.xlu0 0
    %1012 = vperm.xlu0 %1011, %v34
    %v1013 = vpop.permute.xlu0 %1012
    %v1015 = vmul.f32 %v1013, %v1004
    %v1016 = vmul.f32 %v1013, %v1006
    %v1017 = vand.u32 2147483647, %v1015
    %vm1018 = vcmp.le.f32.partialorder %v1017, 0.7853982
    %vm1019 = vcmp.lt.s32.totalorder %v1015, 0
    %v1020 = vand.u32 %v1015, 2139095040
    %v1021 = vshrl.u32 %v1020, 23
    %v1022 = vsub.s32 %v1021, 127
    %v1023 = vand.u32 2147483647, %v1015
    %v1024 = vand.u32 %v1023, 8388607
    %v1025 = vor.u32 %v1024, 8388608
    %v1026 = vsub.s32 0, %v1025
    %v1027 = vadd.s32 %v1022, 1
    %vm1028 = vcmp.gt.s32.totalorder %v1027, 0
    %v1029 = vsel %vm1028, %v1027, 0
    %v1030 = vshrl.u32 %v1029, 5
    %v1031 = vand.u32 %v1029, 31
    %v1032 = vsub.s32 32, %v1031
    %v1033 = vshrl.u32 683565275, %v1032
    %v1034 = vshll.u32 683565275, %v1031
    %v1035 = vshrl.u32 2475754826, %v1032
    %v1036 = vor.u32 %v1034, %v1035
    %v1037 = vshll.u32 2475754826, %v1031
    %v1038 = vshrl.u32 2131351028, %v1032
    %v1039 = vor.u32 %v1037, %v1038
    %v1040 = vshll.u32 2131351028, %v1031
    %v1041 = vshrl.u32 2102212464, %v1032
    %v1042 = vor.u32 %v1040, %v1041
    %v1043 = vshll.u32 2102212464, %v1031
    %v1044 = vshrl.u32 920167782, %v1032
    %v1045 = vor.u32 %v1043, %v1044
    %v1046 = vshll.u32 920167782, %v1031
    %v1047 = vshrl.u32 1326507024, %v1032
    %v1048 = vor.u32 %v1046, %v1047
    %vm1049 = vcmp.lt.s32.totalorder %v1030, 1
    %vm1050 = vcmp.lt.s32.totalorder %v1030, 2
    %vm1051 = vcmp.lt.s32.totalorder %v1030, 3
    %vm1052 = vcmp.lt.s32.totalorder %v1030, 4
    %v1053 = vsel %vm1049, %v1033, %v1036
    %v1054 = vsel %vm1052, %v1042, 2102212464
    %v1055 = vsel %vm1051, %v1039, %v1054
    %v1056 = vsel %vm1050, %v1053, %v1055
    %v1057 = vsel %vm1049, %v1036, %v1039
    %v1058 = vsel %vm1052, %v1045, 920167782
    %v1059 = vsel %vm1051, %v1042, %v1058
    %v1060 = vsel %vm1050, %v1057, %v1059
    %v1061 = vsel %vm1049, %v1039, %v1042
    %v1062 = vsel %vm1052, %v1048, 1326507024
    %v1063 = vsel %vm1051, %v1045, %v1062
    %v1064 = vsel %vm1050, %v1061, %v1063
    %v1065 = vshll.u32 %v1025, 8
    %v1066 = vmul.u32.u64.compose %v1065, %v1064
    %v1067 = vextract.low.u32 %v1066
    %v1068 = vextract.high.u32 %v1066
    %v1069 = vmul.u32.u64.compose %v1065, %v1060
    %v1070 = vextract.low.u32 %v1069
    %v1071 = vextract.high.u32 %v1069
    %v1072 = vmul.u32 %v1065, %v1056
    %v1073 = vadd.s32 %v1068, %v1070
    %vm1074 = vc.u32 %v1068, %v1070
    %v1075 = vadd.s32 %v1071, 1
    %v1076 = vsel %vm1074, %v1075, %v1071
    %v1077 = vadd.s32 %v1072, %v1076
    %v1078 = vadd.s32 %v1077, 536870912
    %v1079 = vshrl.u32 %v1078, 30
    %v1080 = vshll.u32 %v1079, 30
    %v1081 = vsub.s32 %v1077, %v1080
    %vm1082 = vcmp.lt.s32.totalorder %v1081, 0
    %v1083 = vsub.s32 0, %v1081
    %v1084 = vsel %vm1082, %v1083, %v1081
    %v1085 = vclz %v1084
    %v1086 = vsub.s32 %v1085, 2
    %vm1087 = vcmp.gt.s32.totalorder 0, %v1086
    %v1088 = vsel %vm1087, 0, %v1086
    %v1089 = vsub.s32 32, %v1088
    %v1090 = vshll.u32 %v1081, %v1088
    %v1091 = vshrl.u32 %v1073, %v1089
    %v1092 = vor.u32 %v1090, %v1091
    %v1093 = vsub.s32 4294967266, %v1088
    %v1094 = vadd.s32 %v1093, 127
    %v1095 = vshll.u32 %v1094, 23
    %v1096 = vor.u32 4788187, %v1095
    %v1097 = vand.u32 2147483647, %v1096
    %v1099 = vcvt.s32.f32 %v1092
    %v1100 = vmul.f32 %v1099, %v1097
    %v1101 = vxor.u32 %v1100, 2147483648
    %v1102 = vsel %vm1019, %v1101, %v1100
    %v1103 = vsub.s32 4, %v1079
    %v1104 = vsel %vm1019, %v1103, %v1079
    %v1105 = vsel %vm1018, %v1015, %v1102
    %v1106 = vsel %vm1018, 0, %v1104
    %v1107 = vcosq.f32.pop %v1105
    %v1108 = vsinq.f32.pop %v1105
    %vm1109 = vweird.f32 %v1015
    %v1110 = vadd.s32 %v1106, 3
    %v1111 = vand.u32 %v1110, 3
    %vm1112 = vcmp.lt.s32.totalorder %v1111, 2
    %vm1113 = vcmp.eq.s32.totalorder %v1111, 0
    %v1114 = vxor.u32 %v1108, 2147483648
    %v1115 = vsel %vm1113, %v1107, %v1114
    %vm1116 = vcmp.eq.s32.totalorder %v1111, 2
    %v1117 = vxor.u32 %v1107, 2147483648
    %v1118 = vsel %vm1116, %v1117, %v1108
    %v1119 = vsel %vm1112, %v1115, %v1118
    %v1120 = vsel %vm1109, nan, %v1119
    %v1121 = vand.u32 2147483647, %v1016
    %vm1122 = vcmp.le.f32.partialorder %v1121, 0.7853982
    %vm1123 = vcmp.lt.s32.totalorder %v1016, 0
    %v1124 = vand.u32 %v1016, 2139095040
    %v1125 = vshrl.u32 %v1124, 23
    %v1126 = vsub.s32 %v1125, 127
    %v1127 = vand.u32 2147483647, %v1016
    %v1128 = vand.u32 %v1127, 8388607
    %v1129 = vor.u32 %v1128, 8388608
    %v1130 = vsub.s32 0, %v1129
    %v1131 = vadd.s32 %v1126, 1
    %vm1132 = vcmp.gt.s32.totalorder %v1131, 0
    %v1133 = vsel %vm1132, %v1131, 0
    %v1134 = vshrl.u32 %v1133, 5
    %v1135 = vand.u32 %v1133, 31
    %v1136 = vsub.s32 32, %v1135
    %v1137 = vshrl.u32 683565275, %v1136
    %v1138 = vshll.u32 683565275, %v1135
    %v1139 = vshrl.u32 2475754826, %v1136
    %v1140 = vor.u32 %v1138, %v1139
    %v1141 = vshll.u32 2475754826, %v1135
    %v1142 = vshrl.u32 2131351028, %v1136
    %v1143 = vor.u32 %v1141, %v1142
    %v1144 = vshll.u32 2131351028, %v1135
    %v1145 = vshrl.u32 2102212464, %v1136
    %v1146 = vor.u32 %v1144, %v1145
    %v1147 = vshll.u32 2102212464, %v1135
    %v1148 = vshrl.u32 920167782, %v1136
    %v1149 = vor.u32 %v1147, %v1148
    %v1150 = vshll.u32 920167782, %v1135
    %v1151 = vshrl.u32 1326507024, %v1136
    %v1152 = vor.u32 %v1150, %v1151
    %vm1153 = vcmp.lt.s32.totalorder %v1134, 1
    %vm1154 = vcmp.lt.s32.totalorder %v1134, 2
    %vm1155 = vcmp.lt.s32.totalorder %v1134, 3
    %vm1156 = vcmp.lt.s32.totalorder %v1134, 4
    %v1157 = vsel %vm1153, %v1137, %v1140
    %v1158 = vsel %vm1156, %v1146, 2102212464
    %v1159 = vsel %vm1155, %v1143, %v1158
    %v1160 = vsel %vm1154, %v1157, %v1159
    %v1161 = vsel %vm1153, %v1140, %v1143
    %v1162 = vsel %vm1156, %v1149, 920167782
    %v1163 = vsel %vm1155, %v1146, %v1162
    %v1164 = vsel %vm1154, %v1161, %v1163
    %v1165 = vsel %vm1153, %v1143, %v1146
    %v1166 = vsel %vm1156, %v1152, 1326507024
    %v1167 = vsel %vm1155, %v1149, %v1166
    %v1168 = vsel %vm1154, %v1165, %v1167
    %v1169 = vshll.u32 %v1129, 8
    %v1170 = vmul.u32.u64.compose %v1169, %v1168
    %v1171 = vextract.low.u32 %v1170
    %v1172 = vextract.high.u32 %v1170
    %v1173 = vmul.u32.u64.compose %v1169, %v1164
    %v1174 = vextract.low.u32 %v1173
    %v1175 = vextract.high.u32 %v1173
    %v1176 = vmul.u32 %v1169, %v1160
    %v1177 = vadd.s32 %v1172, %v1174
    %vm1178 = vc.u32 %v1172, %v1174
    %v1179 = vadd.s32 %v1175, 1
    %v1180 = vsel %vm1178, %v1179, %v1175
    %v1181 = vadd.s32 %v1176, %v1180
    %v1182 = vadd.s32 %v1181, 536870912
    %v1183 = vshrl.u32 %v1182, 30
    %v1184 = vshll.u32 %v1183, 30
    %v1185 = vsub.s32 %v1181, %v1184
    %vm1186 = vcmp.lt.s32.totalorder %v1185, 0
    %v1187 = vsub.s32 0, %v1185
    %v1188 = vsel %vm1186, %v1187, %v1185
    %v1189 = vclz %v1188
    %v1190 = vsub.s32 %v1189, 2
    %vm1191 = vcmp.gt.s32.totalorder 0, %v1190
    %v1192 = vsel %vm1191, 0, %v1190
    %v1193 = vsub.s32 32, %v1192
    %v1194 = vshll.u32 %v1185, %v1192
    %v1195 = vshrl.u32 %v1177, %v1193
    %v1196 = vor.u32 %v1194, %v1195
    %v1197 = vsub.s32 4294967266, %v1192
    %v1198 = vadd.s32 %v1197, 127
    %v1199 = vshll.u32 %v1198, 23
    %v1200 = vor.u32 4788187, %v1199
    %v1201 = vand.u32 2147483647, %v1200
    %v1203 = vcvt.s32.f32 %v1196
    %v1204 = vmul.f32 %v1203, %v1201
    %v1205 = vxor.u32 %v1204, 2147483648
    %v1206 = vsel %vm1123, %v1205, %v1204
    %v1207 = vsub.s32 4, %v1183
    %v1208 = vsel %vm1123, %v1207, %v1183
    %v1209 = vsel %vm1122, %v1016, %v1206
    %v1210 = vsel %vm1122, 0, %v1208
    %v1211 = vcosq.f32.pop %v1209
    %v1212 = vsinq.f32.pop %v1209
    %vm1213 = vweird.f32 %v1016
    %v1214 = vadd.s32 %v1210, 3
    %v1215 = vand.u32 %v1214, 3
    %vm1216 = vcmp.lt.s32.totalorder %v1215, 2
    %vm1217 = vcmp.eq.s32.totalorder %v1215, 0
    %v1218 = vxor.u32 %v1212, 2147483648
    %v1219 = vsel %vm1217, %v1211, %v1218
    %vm1220 = vcmp.eq.s32.totalorder %v1215, 2
    %v1221 = vxor.u32 %v1211, 2147483648
    %v1222 = vsel %vm1220, %v1221, %v1212
    %v1223 = vsel %vm1216, %v1219, %v1222
    %v1224 = vsel %vm1213, nan, %v1223
    %1226 = vset.pattern.permute.xlu0 0
    %1227 = vperm.xlu0 %1226, %v35
    %v1228 = vpop.permute.xlu0 %1227
    %v1230 = vmul.f32 %v1228, %v1120
    %v1231 = vmul.f32 %v1228, %v1224
    %v1232 = vmul.f32 %v1230, %v1120
    %v1233 = vmul.f32 %v1231, %v1224
    %v1234 = vadd.f32 %v1004, %v1232
    %v1235 = vadd.f32 %v1006, %v1233
    %v1236 = vpack.c.bf16 %v1234, %v1234
    %v1237 = vpack.c.bf16 %v1235, %v1235
    %1239 = vset.pattern.permute.xlu0 0
    %1240 = vperm.xlu0 %1239, %v37
    %v1241 = vpop.permute.xlu0 %1240
    %vm1243 = vcmask 64512
    %v1245 = vsel %vm1243, %v25, 0
    %v1248 = vsel %vm962, %v1236, 0
    %v1251 = vsel %vm962, %v1237, 0
    %1253 = vmatprep.subr.bf16.mxu0 %v1251
    %1254 = vmatpush1.bf16.msra.mxu0 %v1248
    %1255 = vmatprep.subr.bf16.mxu0 0
    %1256 = vmatpush1.bf16.msra.mxu0 0
    %1257 = vmatprep.subr.bf16.mxu0 0
    %1258 = vmatpush1.bf16.msra.mxu0 0
    %1259 = vmatprep.subr.bf16.mxu0 0
    %1260 = vmatpush1.bf16.msra.mxu0 0
    %1261 = vmatprep.subr.bf16.mxu0 0
    %1262 = vmatpush1.bf16.msra.mxu0 0
    %1263 = vmatprep.subr.bf16.mxu0 0
    %1264 = vmatpush1.bf16.msra.mxu0 0
    %1265 = vmatprep.subr.bf16.mxu0 0
    %1266 = vmatpush1.bf16.msra.mxu0 0
    %1267 = vmatprep.subr.bf16.mxu0 0
    %1268 = vmatpush1.bf16.msra.mxu0 0
    %1269 = vmatprep.subr.bf16.mxu0 0
    %1270 = vmatpush1.bf16.msra.mxu0 0
    %1271 = vmatprep.subr.bf16.mxu0 0
    %1272 = vmatpush1.bf16.msra.mxu0 0
    %1273 = vmatprep.subr.bf16.mxu0 0
    %1274 = vmatpush1.bf16.msra.mxu0 0
    %1275 = vmatprep.subr.bf16.mxu0 0
    %1276 = vmatpush1.bf16.msra.mxu0 0
    %1277 = vmatprep.subr.bf16.mxu0 0
    %1278 = vmatpush1.bf16.msra.mxu0 0
    %1279 = vmatprep.subr.bf16.mxu0 0
    %1280 = vmatpush1.bf16.msra.mxu0 0
    %1281 = vmatprep.subr.bf16.mxu0 0
    %1282 = vmatpush1.bf16.msra.mxu0 0
    %1283 = vmatprep.subr.bf16.mxu0 0
    %1284 = vmatpush1.bf16.msra.mxu0 0
    %1285 = vmatprep.mubr.bf16.mxu0 0
    %1286 = vmatmul.mubr.bf16.gmra.mrb[0].mxu0 %v1245
    %v1287 = vpop.f32.mrb[0].mxu0
    %v1288 = vadd.f32 %v1241, %v1287
    %v1289 = vpop.f32.mrb[0].mxu0
    %v1290 = vadd.f32 %v1241, %v1289
    %v1291 = vpop.f32.mrb[0].mxu0
    %v1292 = vpop.f32.mrb[0].mxu0
    %1293 = vdwg.mxu0
    %v1294 = vadd.f32 %v635, %v1288
    %v1295 = vadd.f32 %v637, %v1290
    %1297 = vset.pattern.permute.xlu0 0
    %1298 = vperm.xlu0 %1297, %v38
    %v1299 = vpop.permute.xlu0 %1298
    %v1301 = vmul.f32 %v1299, %v1294
    %v1302 = vmul.f32 %v1299, %v1295
    %v1303 = vand.u32 2147483647, %v1301
    %vm1304 = vcmp.le.f32.partialorder %v1303, 0.7853982
    %vm1305 = vcmp.lt.s32.totalorder %v1301, 0
    %v1306 = vand.u32 %v1301, 2139095040
    %v1307 = vshrl.u32 %v1306, 23
    %v1308 = vsub.s32 %v1307, 127
    %v1309 = vand.u32 2147483647, %v1301
    %v1310 = vand.u32 %v1309, 8388607
    %v1311 = vor.u32 %v1310, 8388608
    %v1312 = vsub.s32 0, %v1311
    %v1313 = vadd.s32 %v1308, 1
    %vm1314 = vcmp.gt.s32.totalorder %v1313, 0
    %v1315 = vsel %vm1314, %v1313, 0
    %v1316 = vshrl.u32 %v1315, 5
    %v1317 = vand.u32 %v1315, 31
    %v1318 = vsub.s32 32, %v1317
    %v1319 = vshrl.u32 683565275, %v1318
    %v1320 = vshll.u32 683565275, %v1317
    %v1321 = vshrl.u32 2475754826, %v1318
    %v1322 = vor.u32 %v1320, %v1321
    %v1323 = vshll.u32 2475754826, %v1317
    %v1324 = vshrl.u32 2131351028, %v1318
    %v1325 = vor.u32 %v1323, %v1324
    %v1326 = vshll.u32 2131351028, %v1317
    %v1327 = vshrl.u32 2102212464, %v1318
    %v1328 = vor.u32 %v1326, %v1327
    %v1329 = vshll.u32 2102212464, %v1317
    %v1330 = vshrl.u32 920167782, %v1318
    %v1331 = vor.u32 %v1329, %v1330
    %v1332 = vshll.u32 920167782, %v1317
    %v1333 = vshrl.u32 1326507024, %v1318
    %v1334 = vor.u32 %v1332, %v1333
    %vm1335 = vcmp.lt.s32.totalorder %v1316, 1
    %vm1336 = vcmp.lt.s32.totalorder %v1316, 2
    %vm1337 = vcmp.lt.s32.totalorder %v1316, 3
    %vm1338 = vcmp.lt.s32.totalorder %v1316, 4
    %v1339 = vsel %vm1335, %v1319, %v1322
    %v1340 = vsel %vm1338, %v1328, 2102212464
    %v1341 = vsel %vm1337, %v1325, %v1340
    %v1342 = vsel %vm1336, %v1339, %v1341
    %v1343 = vsel %vm1335, %v1322, %v1325
    %v1344 = vsel %vm1338, %v1331, 920167782
    %v1345 = vsel %vm1337, %v1328, %v1344
    %v1346 = vsel %vm1336, %v1343, %v1345
    %v1347 = vsel %vm1335, %v1325, %v1328
    %v1348 = vsel %vm1338, %v1334, 1326507024
    %v1349 = vsel %vm1337, %v1331, %v1348
    %v1350 = vsel %vm1336, %v1347, %v1349
    %v1351 = vshll.u32 %v1311, 8
    %v1352 = vmul.u32.u64.compose %v1351, %v1350
    %v1353 = vextract.low.u32 %v1352
    %v1354 = vextract.high.u32 %v1352
    %v1355 = vmul.u32.u64.compose %v1351, %v1346
    %v1356 = vextract.low.u32 %v1355
    %v1357 = vextract.high.u32 %v1355
    %v1358 = vmul.u32 %v1351, %v1342
    %v1359 = vadd.s32 %v1354, %v1356
    %vm1360 = vc.u32 %v1354, %v1356
    %v1361 = vadd.s32 %v1357, 1
    %v1362 = vsel %vm1360, %v1361, %v1357
    %v1363 = vadd.s32 %v1358, %v1362
    %v1364 = vadd.s32 %v1363, 536870912
    %v1365 = vshrl.u32 %v1364, 30
    %v1366 = vshll.u32 %v1365, 30
    %v1367 = vsub.s32 %v1363, %v1366
    %vm1368 = vcmp.lt.s32.totalorder %v1367, 0
    %v1369 = vsub.s32 0, %v1367
    %v1370 = vsel %vm1368, %v1369, %v1367
    %v1371 = vclz %v1370
    %v1372 = vsub.s32 %v1371, 2
    %vm1373 = vcmp.gt.s32.totalorder 0, %v1372
    %v1374 = vsel %vm1373, 0, %v1372
    %v1375 = vsub.s32 32, %v1374
    %v1376 = vshll.u32 %v1367, %v1374
    %v1377 = vshrl.u32 %v1359, %v1375
    %v1378 = vor.u32 %v1376, %v1377
    %v1379 = vsub.s32 4294967266, %v1374
    %v1380 = vadd.s32 %v1379, 127
    %v1381 = vshll.u32 %v1380, 23
    %v1382 = vor.u32 4788187, %v1381
    %v1383 = vand.u32 2147483647, %v1382
    %v1385 = vcvt.s32.f32 %v1378
    %v1386 = vmul.f32 %v1385, %v1383
    %v1387 = vxor.u32 %v1386, 2147483648
    %v1388 = vsel %vm1305, %v1387, %v1386
    %v1389 = vsub.s32 4, %v1365
    %v1390 = vsel %vm1305, %v1389, %v1365
    %v1391 = vsel %vm1304, %v1301, %v1388
    %v1392 = vsel %vm1304, 0, %v1390
    %v1393 = vcosq.f32.pop %v1391
    %v1394 = vsinq.f32.pop %v1391
    %vm1395 = vweird.f32 %v1301
    %v1396 = vadd.s32 %v1392, 3
    %v1397 = vand.u32 %v1396, 3
    %vm1398 = vcmp.lt.s32.totalorder %v1397, 2
    %vm1399 = vcmp.eq.s32.totalorder %v1397, 0
    %v1400 = vxor.u32 %v1394, 2147483648
    %v1401 = vsel %vm1399, %v1393, %v1400
    %vm1402 = vcmp.eq.s32.totalorder %v1397, 2
    %v1403 = vxor.u32 %v1393, 2147483648
    %v1404 = vsel %vm1402, %v1403, %v1394
    %v1405 = vsel %vm1398, %v1401, %v1404
    %v1406 = vsel %vm1395, nan, %v1405
    %v1407 = vand.u32 2147483647, %v1302
    %vm1408 = vcmp.le.f32.partialorder %v1407, 0.7853982
    %vm1409 = vcmp.lt.s32.totalorder %v1302, 0
    %v1410 = vand.u32 %v1302, 2139095040
    %v1411 = vshrl.u32 %v1410, 23
    %v1412 = vsub.s32 %v1411, 127
    %v1413 = vand.u32 2147483647, %v1302
    %v1414 = vand.u32 %v1413, 8388607
    %v1415 = vor.u32 %v1414, 8388608
    %v1416 = vsub.s32 0, %v1415
    %v1417 = vadd.s32 %v1412, 1
    %vm1418 = vcmp.gt.s32.totalorder %v1417, 0
    %v1419 = vsel %vm1418, %v1417, 0
    %v1420 = vshrl.u32 %v1419, 5
    %v1421 = vand.u32 %v1419, 31
    %v1422 = vsub.s32 32, %v1421
    %v1423 = vshrl.u32 683565275, %v1422
    %v1424 = vshll.u32 683565275, %v1421
    %v1425 = vshrl.u32 2475754826, %v1422
    %v1426 = vor.u32 %v1424, %v1425
    %v1427 = vshll.u32 2475754826, %v1421
    %v1428 = vshrl.u32 2131351028, %v1422
    %v1429 = vor.u32 %v1427, %v1428
    %v1430 = vshll.u32 2131351028, %v1421
    %v1431 = vshrl.u32 2102212464, %v1422
    %v1432 = vor.u32 %v1430, %v1431
    %v1433 = vshll.u32 2102212464, %v1421
    %v1434 = vshrl.u32 920167782, %v1422
    %v1435 = vor.u32 %v1433, %v1434
    %v1436 = vshll.u32 920167782, %v1421
    %v1437 = vshrl.u32 1326507024, %v1422
    %v1438 = vor.u32 %v1436, %v1437
    %vm1439 = vcmp.lt.s32.totalorder %v1420, 1
    %vm1440 = vcmp.lt.s32.totalorder %v1420, 2
    %vm1441 = vcmp.lt.s32.totalorder %v1420, 3
    %vm1442 = vcmp.lt.s32.totalorder %v1420, 4
    %v1443 = vsel %vm1439, %v1423, %v1426
    %v1444 = vsel %vm1442, %v1432, 2102212464
    %v1445 = vsel %vm1441, %v1429, %v1444
    %v1446 = vsel %vm1440, %v1443, %v1445
    %v1447 = vsel %vm1439, %v1426, %v1429
    %v1448 = vsel %vm1442, %v1435, 920167782
    %v1449 = vsel %vm1441, %v1432, %v1448
    %v1450 = vsel %vm1440, %v1447, %v1449
    %v1451 = vsel %vm1439, %v1429, %v1432
    %v1452 = vsel %vm1442, %v1438, 1326507024
    %v1453 = vsel %vm1441, %v1435, %v1452
    %v1454 = vsel %vm1440, %v1451, %v1453
    %v1455 = vshll.u32 %v1415, 8
    %v1456 = vmul.u32.u64.compose %v1455, %v1454
    %v1457 = vextract.low.u32 %v1456
    %v1458 = vextract.high.u32 %v1456
    %v1459 = vmul.u32.u64.compose %v1455, %v1450
    %v1460 = vextract.low.u32 %v1459
    %v1461 = vextract.high.u32 %v1459
    %v1462 = vmul.u32 %v1455, %v1446
    %v1463 = vadd.s32 %v1458, %v1460
    %vm1464 = vc.u32 %v1458, %v1460
    %v1465 = vadd.s32 %v1461, 1
    %v1466 = vsel %vm1464, %v1465, %v1461
    %v1467 = vadd.s32 %v1462, %v1466
    %v1468 = vadd.s32 %v1467, 536870912
    %v1469 = vshrl.u32 %v1468, 30
    %v1470 = vshll.u32 %v1469, 30
    %v1471 = vsub.s32 %v1467, %v1470
    %vm1472 = vcmp.lt.s32.totalorder %v1471, 0
    %v1473 = vsub.s32 0, %v1471
    %v1474 = vsel %vm1472, %v1473, %v1471
    %v1475 = vclz %v1474
    %v1476 = vsub.s32 %v1475, 2
    %vm1477 = vcmp.gt.s32.totalorder 0, %v1476
    %v1478 = vsel %vm1477, 0, %v1476
    %v1479 = vsub.s32 32, %v1478
    %v1480 = vshll.u32 %v1471, %v1478
    %v1481 = vshrl.u32 %v1463, %v1479
    %v1482 = vor.u32 %v1480, %v1481
    %v1483 = vsub.s32 4294967266, %v1478
    %v1484 = vadd.s32 %v1483, 127
    %v1485 = vshll.u32 %v1484, 23
    %v1486 = vor.u32 4788187, %v1485
    %v1487 = vand.u32 2147483647, %v1486
    %v1489 = vcvt.s32.f32 %v1482
    %v1490 = vmul.f32 %v1489, %v1487
    %v1491 = vxor.u32 %v1490, 2147483648
    %v1492 = vsel %vm1409, %v1491, %v1490
    %v1493 = vsub.s32 4, %v1469
    %v1494 = vsel %vm1409, %v1493, %v1469
    %v1495 = vsel %vm1408, %v1302, %v1492
    %v1496 = vsel %vm1408, 0, %v1494
    %v1497 = vcosq.f32.pop %v1495
    %v1498 = vsinq.f32.pop %v1495
    %vm1499 = vweird.f32 %v1302
    %v1500 = vadd.s32 %v1496, 3
    %v1501 = vand.u32 %v1500, 3
    %vm1502 = vcmp.lt.s32.totalorder %v1501, 2
    %vm1503 = vcmp.eq.s32.totalorder %v1501, 0
    %v1504 = vxor.u32 %v1498, 2147483648
    %v1505 = vsel %vm1503, %v1497, %v1504
    %vm1506 = vcmp.eq.s32.totalorder %v1501, 2
    %v1507 = vxor.u32 %v1497, 2147483648
    %v1508 = vsel %vm1506, %v1507, %v1498
    %v1509 = vsel %vm1502, %v1505, %v1508
    %v1510 = vsel %vm1499, nan, %v1509
    %1512 = vset.pattern.permute.xlu0 0
    %1513 = vperm.xlu0 %1512, %v39
    %v1514 = vpop.permute.xlu0 %1513
    %v1516 = vmul.f32 %v1514, %v1406
    %v1517 = vmul.f32 %v1514, %v1510
    %v1518 = vmul.f32 %v1516, %v1406
    %v1519 = vmul.f32 %v1517, %v1510
    %v1520 = vadd.f32 %v1294, %v1518
    %v1521 = vadd.f32 %v1295, %v1519
    %1522 = vrot.lane.b32.xlu0 %v1520, 9
    %v1523 = vpop.permute.xlu0 %1522
    %1524 = vrot.lane.b32.xlu0 %v1521, 9
    %v1525 = vpop.permute.xlu0 %1524
    %vm1526 = vcmp.lt.s32.totalorder %v515, 9
    %v1527 = vsel %vm1526, %v1523, %v1525
    %v1528 = vsel %vm1526, %v1525, %v1523
    %v1529 = vlaneseq
    %v1530 = vshrl.u32 %v1529, 7
    %v1531 = vsub.s32 2, %v1530
    %v1532 = vrot.slane %v19, %v1531
    %v1533 = vlaneseq
    %v1534 = vshrl.u32 %v1533, 7
    %v1535 = vsub.s32 2, %v1534
    %v1536 = vrot.slane %v20, %v1535
    %v1537 = vmul.f32 %v1528, %v1532
    %v1538 = vmul.f32 %v1527, %v1536
    %1539 = vrot.lane.b32.xlu0 %v1520, 6
    %v1540 = vpop.permute.xlu0 %1539
    %1541 = vrot.lane.b32.xlu0 %v1521, 6
    %v1542 = vpop.permute.xlu0 %1541
    %vm1543 = vcmp.lt.s32.totalorder %v515, 6
    %v1544 = vsel %vm1543, %v1540, %v1542
    %v1545 = vsel %vm1543, %v1542, %v1540
    %v1546 = vlaneseq
    %v1547 = vshrl.u32 %v1546, 7
    %v1548 = vsub.s32 3, %v1547
    %v1549 = vrot.slane %v19, %v1548
    %v1550 = vlaneseq
    %v1551 = vshrl.u32 %v1550, 7
    %v1552 = vsub.s32 3, %v1551
    %v1553 = vrot.slane %v20, %v1552
    %v1554 = vmul.f32 %v1545, %v1549
    %v1555 = vmul.f32 %v1544, %v1553
    %1556 = vrot.lane.b32.xlu0 %v1520, 3
    %v1557 = vpop.permute.xlu0 %1556
    %1558 = vrot.lane.b32.xlu0 %v1521, 3
    %v1559 = vpop.permute.xlu0 %1558
    %v1560 = vsel %vm871, %v1557, %v1559
    %v1561 = vsel %vm871, %v1559, %v1557
    %v1562 = vmul.f32 %v1561, %v877
    %v1563 = vmul.f32 %v1560, %v881
    %1564 = vrot.lane.b32.xlu0 %v1520, 125
    %v1565 = vpop.permute.xlu0 %1564
    %1566 = vrot.lane.b32.xlu0 %v1521, 125
    %v1567 = vpop.permute.xlu0 %1566
    %v1568 = vsel %vm929, %v1565, %v1567
    %v1569 = vsel %vm929, %v1567, %v1565
    %v1570 = vmul.f32 %v1568, %v935
    %v1571 = vmul.f32 %v1569, %v939
    %1572 = vrot.lane.b32.xlu0 %v1520, 122
    %v1573 = vpop.permute.xlu0 %1572
    %1574 = vrot.lane.b32.xlu0 %v1521, 122
    %v1575 = vpop.permute.xlu0 %1574
    %vm1576 = vcmp.lt.s32.totalorder %v515, 122
    %v1577 = vsel %vm1576, %v1573, %v1575
    %v1578 = vsel %vm1576, %v1575, %v1573
    %v1579 = vlaneseq
    %v1580 = vshrl.u32 %v1579, 7
    %v1581 = vsub.s32 2, %v1580
    %v1582 = vrot.slane %v21, %v1581
    %v1583 = vlaneseq
    %v1584 = vshrl.u32 %v1583, 7
    %v1585 = vsub.s32 2, %v1584
    %v1586 = vrot.slane %v22, %v1585
    %v1587 = vmul.f32 %v1577, %v1582
    %v1588 = vmul.f32 %v1578, %v1586
    %1589 = vrot.lane.b32.xlu0 %v1520, 119
    %v1590 = vpop.permute.xlu0 %1589
    %1591 = vrot.lane.b32.xlu0 %v1521, 119
    %v1592 = vpop.permute.xlu0 %1591
    %vm1593 = vcmp.lt.s32.totalorder %v515, 119
    %v1594 = vsel %vm1593, %v1590, %v1592
    %v1595 = vsel %vm1593, %v1592, %v1590
    %v1596 = vlaneseq
    %v1597 = vshrl.u32 %v1596, 7
    %v1598 = vsub.s32 3, %v1597
    %v1599 = vrot.slane %v21, %v1598
    %v1600 = vlaneseq
    %v1601 = vshrl.u32 %v1600, 7
    %v1602 = vsub.s32 3, %v1601
    %v1603 = vrot.slane %v22, %v1602
    %v1604 = vmul.f32 %v1594, %v1599
    %v1605 = vmul.f32 %v1595, %v1603
    %v1606 = vpack.c.bf16 %v1554, %v1537
    %v1607 = vpack.c.bf16 %v1555, %v1538
    %v1608 = vpack.c.bf16 %v1520, %v1562
    %v1609 = vpack.c.bf16 %v1521, %v1563
    %v1610 = vpack.c.bf16 %v1587, %v1570
    %v1611 = vpack.c.bf16 %v1588, %v1571
    %v1612 = vpack.c.bf16 %v1604, %v1604
    %v1613 = vpack.c.bf16 %v1605, %v1605
    %1615 = vset.pattern.permute.xlu0 0
    %1616 = vperm.xlu0 %1615, %v42
    %v1617 = vpop.permute.xlu0 %1616
    %v1620 = vsel %vm958, %v24, 0
    %v1623 = vsel %vm962, %v1612, 0
    %v1626 = vsel %vm962, %v1613, 0
    %1628 = vmatprep.subr.bf16.mxu0 %v1607
    %1629 = vmatpush1.bf16.msra.mxu0 %v1606
    %1630 = vmatprep.subr.bf16.mxu0 %v1609
    %1631 = vmatpush1.bf16.msra.mxu0 %v1608
    %1632 = vmatprep.subr.bf16.mxu0 %v1611
    %1633 = vmatpush1.bf16.msra.mxu0 %v1610
    %1634 = vmatprep.subr.bf16.mxu0 %v1626
    %1635 = vmatpush1.bf16.msra.mxu0 %v1623
    %1636 = vmatprep.subr.bf16.mxu0 0
    %1637 = vmatpush1.bf16.msra.mxu0 0
    %1638 = vmatprep.subr.bf16.mxu0 0
    %1639 = vmatpush1.bf16.msra.mxu0 0
    %1640 = vmatprep.subr.bf16.mxu0 0
    %1641 = vmatpush1.bf16.msra.mxu0 0
    %1642 = vmatprep.subr.bf16.mxu0 0
    %1643 = vmatpush1.bf16.msra.mxu0 0
    %1644 = vmatprep.subr.bf16.mxu0 0
    %1645 = vmatpush1.bf16.msra.mxu0 0
    %1646 = vmatprep.subr.bf16.mxu0 0
    %1647 = vmatpush1.bf16.msra.mxu0 0
    %1648 = vmatprep.subr.bf16.mxu0 0
    %1649 = vmatpush1.bf16.msra.mxu0 0
    %1650 = vmatprep.subr.bf16.mxu0 0
    %1651 = vmatpush1.bf16.msra.mxu0 0
    %1652 = vmatprep.subr.bf16.mxu0 0
    %1653 = vmatpush1.bf16.msra.mxu0 0
    %1654 = vmatprep.subr.bf16.mxu0 0
    %1655 = vmatpush1.bf16.msra.mxu0 0
    %1656 = vmatprep.subr.bf16.mxu0 0
    %1657 = vmatpush1.bf16.msra.mxu0 0
    %1658 = vmatprep.subr.bf16.mxu0 0
    %1659 = vmatpush1.bf16.msra.mxu0 0
    %1660 = vmatprep.mubr.bf16.mxu0 0
    %1661 = vmatmul.mubr.bf16.gmra.mrb[0].mxu0 %v1620
    %v1662 = vpop.f32.mrb[0].mxu0
    %v1663 = vadd.f32 %v1617, %v1662
    %v1664 = vpop.f32.mrb[0].mxu0
    %v1665 = vadd.f32 %v1617, %v1664
    %v1666 = vpop.f32.mrb[0].mxu0
    %v1667 = vpop.f32.mrb[0].mxu0
    %1668 = vdwg.mxu0
    %1670 = vset.pattern.permute.xlu0 0
    %1671 = vperm.xlu0 %1670, %v40
    %v1672 = vpop.permute.xlu0 %1671
    %v1674 = vmul.f32 %v1672, %v1663
    %v1675 = vmul.f32 %v1672, %v1665
    %v1676 = vand.u32 2147483647, %v1674
    %vm1677 = vcmp.le.f32.partialorder %v1676, 0.7853982
    %vm1678 = vcmp.lt.s32.totalorder %v1674, 0
    %v1679 = vand.u32 %v1674, 2139095040
    %v1680 = vshrl.u32 %v1679, 23
    %v1681 = vsub.s32 %v1680, 127
    %v1682 = vand.u32 2147483647, %v1674
    %v1683 = vand.u32 %v1682, 8388607
    %v1684 = vor.u32 %v1683, 8388608
    %v1685 = vsub.s32 0, %v1684
    %v1686 = vadd.s32 %v1681, 1
    %vm1687 = vcmp.gt.s32.totalorder %v1686, 0
    %v1688 = vsel %vm1687, %v1686, 0
    %v1689 = vshrl.u32 %v1688, 5
    %v1690 = vand.u32 %v1688, 31
    %v1691 = vsub.s32 32, %v1690
    %v1692 = vshrl.u32 683565275, %v1691
    %v1693 = vshll.u32 683565275, %v1690
    %v1694 = vshrl.u32 2475754826, %v1691
    %v1695 = vor.u32 %v1693, %v1694
    %v1696 = vshll.u32 2475754826, %v1690
    %v1697 = vshrl.u32 2131351028, %v1691
    %v1698 = vor.u32 %v1696, %v1697
    %v1699 = vshll.u32 2131351028, %v1690
    %v1700 = vshrl.u32 2102212464, %v1691
    %v1701 = vor.u32 %v1699, %v1700
    %v1702 = vshll.u32 2102212464, %v1690
    %v1703 = vshrl.u32 920167782, %v1691
    %v1704 = vor.u32 %v1702, %v1703
    %v1705 = vshll.u32 920167782, %v1690
    %v1706 = vshrl.u32 1326507024, %v1691
    %v1707 = vor.u32 %v1705, %v1706
    %vm1708 = vcmp.lt.s32.totalorder %v1689, 1
    %vm1709 = vcmp.lt.s32.totalorder %v1689, 2
    %vm1710 = vcmp.lt.s32.totalorder %v1689, 3
    %vm1711 = vcmp.lt.s32.totalorder %v1689, 4
    %v1712 = vsel %vm1708, %v1692, %v1695
    %v1713 = vsel %vm1711, %v1701, 2102212464
    %v1714 = vsel %vm1710, %v1698, %v1713
    %v1715 = vsel %vm1709, %v1712, %v1714
    %v1716 = vsel %vm1708, %v1695, %v1698
    %v1717 = vsel %vm1711, %v1704, 920167782
    %v1718 = vsel %vm1710, %v1701, %v1717
    %v1719 = vsel %vm1709, %v1716, %v1718
    %v1720 = vsel %vm1708, %v1698, %v1701
    %v1721 = vsel %vm1711, %v1707, 1326507024
    %v1722 = vsel %vm1710, %v1704, %v1721
    %v1723 = vsel %vm1709, %v1720, %v1722
    %v1724 = vshll.u32 %v1684, 8
    %v1725 = vmul.u32.u64.compose %v1724, %v1723
    %v1726 = vextract.low.u32 %v1725
    %v1727 = vextract.high.u32 %v1725
    %v1728 = vmul.u32.u64.compose %v1724, %v1719
    %v1729 = vextract.low.u32 %v1728
    %v1730 = vextract.high.u32 %v1728
    %v1731 = vmul.u32 %v1724, %v1715
    %v1732 = vadd.s32 %v1727, %v1729
    %vm1733 = vc.u32 %v1727, %v1729
    %v1734 = vadd.s32 %v1730, 1
    %v1735 = vsel %vm1733, %v1734, %v1730
    %v1736 = vadd.s32 %v1731, %v1735
    %v1737 = vadd.s32 %v1736, 536870912
    %v1738 = vshrl.u32 %v1737, 30
    %v1739 = vshll.u32 %v1738, 30
    %v1740 = vsub.s32 %v1736, %v1739
    %vm1741 = vcmp.lt.s32.totalorder %v1740, 0
    %v1742 = vsub.s32 0, %v1740
    %v1743 = vsel %vm1741, %v1742, %v1740
    %v1744 = vclz %v1743
    %v1745 = vsub.s32 %v1744, 2
    %vm1746 = vcmp.gt.s32.totalorder 0, %v1745
    %v1747 = vsel %vm1746, 0, %v1745
    %v1748 = vsub.s32 32, %v1747
    %v1749 = vshll.u32 %v1740, %v1747
    %v1750 = vshrl.u32 %v1732, %v1748
    %v1751 = vor.u32 %v1749, %v1750
    %v1752 = vsub.s32 4294967266, %v1747
    %v1753 = vadd.s32 %v1752, 127
    %v1754 = vshll.u32 %v1753, 23
    %v1755 = vor.u32 4788187, %v1754
    %v1756 = vand.u32 2147483647, %v1755
    %v1758 = vcvt.s32.f32 %v1751
    %v1759 = vmul.f32 %v1758, %v1756
    %v1760 = vxor.u32 %v1759, 2147483648
    %v1761 = vsel %vm1678, %v1760, %v1759
    %v1762 = vsub.s32 4, %v1738
    %v1763 = vsel %vm1678, %v1762, %v1738
    %v1764 = vsel %vm1677, %v1674, %v1761
    %v1765 = vsel %vm1677, 0, %v1763
    %v1766 = vcosq.f32.pop %v1764
    %v1767 = vsinq.f32.pop %v1764
    %vm1768 = vweird.f32 %v1674
    %v1769 = vadd.s32 %v1765, 3
    %v1770 = vand.u32 %v1769, 3
    %vm1771 = vcmp.lt.s32.totalorder %v1770, 2
    %vm1772 = vcmp.eq.s32.totalorder %v1770, 0
    %v1773 = vxor.u32 %v1767, 2147483648
    %v1774 = vsel %vm1772, %v1766, %v1773
    %vm1775 = vcmp.eq.s32.totalorder %v1770, 2
    %v1776 = vxor.u32 %v1766, 2147483648
    %v1777 = vsel %vm1775, %v1776, %v1767
    %v1778 = vsel %vm1771, %v1774, %v1777
    %v1779 = vsel %vm1768, nan, %v1778
    %v1780 = vand.u32 2147483647, %v1675
    %vm1781 = vcmp.le.f32.partialorder %v1780, 0.7853982
    %vm1782 = vcmp.lt.s32.totalorder %v1675, 0
    %v1783 = vand.u32 %v1675, 2139095040
    %v1784 = vshrl.u32 %v1783, 23
    %v1785 = vsub.s32 %v1784, 127
    %v1786 = vand.u32 2147483647, %v1675
    %v1787 = vand.u32 %v1786, 8388607
    %v1788 = vor.u32 %v1787, 8388608
    %v1789 = vsub.s32 0, %v1788
    %v1790 = vadd.s32 %v1785, 1
    %vm1791 = vcmp.gt.s32.totalorder %v1790, 0
    %v1792 = vsel %vm1791, %v1790, 0
    %v1793 = vshrl.u32 %v1792, 5
    %v1794 = vand.u32 %v1792, 31
    %v1795 = vsub.s32 32, %v1794
    %v1796 = vshrl.u32 683565275, %v1795
    %v1797 = vshll.u32 683565275, %v1794
    %v1798 = vshrl.u32 2475754826, %v1795
    %v1799 = vor.u32 %v1797, %v1798
    %v1800 = vshll.u32 2475754826, %v1794
    %v1801 = vshrl.u32 2131351028, %v1795
    %v1802 = vor.u32 %v1800, %v1801
    %v1803 = vshll.u32 2131351028, %v1794
    %v1804 = vshrl.u32 2102212464, %v1795
    %v1805 = vor.u32 %v1803, %v1804
    %v1806 = vshll.u32 2102212464, %v1794
    %v1807 = vshrl.u32 920167782, %v1795
    %v1808 = vor.u32 %v1806, %v1807
    %v1809 = vshll.u32 920167782, %v1794
    %v1810 = vshrl.u32 1326507024, %v1795
    %v1811 = vor.u32 %v1809, %v1810
    %vm1812 = vcmp.lt.s32.totalorder %v1793, 1
    %vm1813 = vcmp.lt.s32.totalorder %v1793, 2
    %vm1814 = vcmp.lt.s32.totalorder %v1793, 3
    %vm1815 = vcmp.lt.s32.totalorder %v1793, 4
    %v1816 = vsel %vm1812, %v1796, %v1799
    %v1817 = vsel %vm1815, %v1805, 2102212464
    %v1818 = vsel %vm1814, %v1802, %v1817
    %v1819 = vsel %vm1813, %v1816, %v1818
    %v1820 = vsel %vm1812, %v1799, %v1802
    %v1821 = vsel %vm1815, %v1808, 920167782
    %v1822 = vsel %vm1814, %v1805, %v1821
    %v1823 = vsel %vm1813, %v1820, %v1822
    %v1824 = vsel %vm1812, %v1802, %v1805
    %v1825 = vsel %vm1815, %v1811, 1326507024
    %v1826 = vsel %vm1814, %v1808, %v1825
    %v1827 = vsel %vm1813, %v1824, %v1826
    %v1828 = vshll.u32 %v1788, 8
    %v1829 = vmul.u32.u64.compose %v1828, %v1827
    %v1830 = vextract.low.u32 %v1829
    %v1831 = vextract.high.u32 %v1829
    %v1832 = vmul.u32.u64.compose %v1828, %v1823
    %v1833 = vextract.low.u32 %v1832
    %v1834 = vextract.high.u32 %v1832
    %v1835 = vmul.u32 %v1828, %v1819
    %v1836 = vadd.s32 %v1831, %v1833
    %vm1837 = vc.u32 %v1831, %v1833
    %v1838 = vadd.s32 %v1834, 1
    %v1839 = vsel %vm1837, %v1838, %v1834
    %v1840 = vadd.s32 %v1835, %v1839
    %v1841 = vadd.s32 %v1840, 536870912
    %v1842 = vshrl.u32 %v1841, 30
    %v1843 = vshll.u32 %v1842, 30
    %v1844 = vsub.s32 %v1840, %v1843
    %vm1845 = vcmp.lt.s32.totalorder %v1844, 0
    %v1846 = vsub.s32 0, %v1844
    %v1847 = vsel %vm1845, %v1846, %v1844
    %v1848 = vclz %v1847
    %v1849 = vsub.s32 %v1848, 2
    %vm1850 = vcmp.gt.s32.totalorder 0, %v1849
    %v1851 = vsel %vm1850, 0, %v1849
    %v1852 = vsub.s32 32, %v1851
    %v1853 = vshll.u32 %v1844, %v1851
    %v1854 = vshrl.u32 %v1836, %v1852
    %v1855 = vor.u32 %v1853, %v1854
    %v1856 = vsub.s32 4294967266, %v1851
    %v1857 = vadd.s32 %v1856, 127
    %v1858 = vshll.u32 %v1857, 23
    %v1859 = vor.u32 4788187, %v1858
    %v1860 = vand.u32 2147483647, %v1859
    %v1862 = vcvt.s32.f32 %v1855
    %v1863 = vmul.f32 %v1862, %v1860
    %v1864 = vxor.u32 %v1863, 2147483648
    %v1865 = vsel %vm1782, %v1864, %v1863
    %v1866 = vsub.s32 4, %v1842
    %v1867 = vsel %vm1782, %v1866, %v1842
    %v1868 = vsel %vm1781, %v1675, %v1865
    %v1869 = vsel %vm1781, 0, %v1867
    %v1870 = vcosq.f32.pop %v1868
    %v1871 = vsinq.f32.pop %v1868
    %vm1872 = vweird.f32 %v1675
    %v1873 = vadd.s32 %v1869, 3
    %v1874 = vand.u32 %v1873, 3
    %vm1875 = vcmp.lt.s32.totalorder %v1874, 2
    %vm1876 = vcmp.eq.s32.totalorder %v1874, 0
    %v1877 = vxor.u32 %v1871, 2147483648
    %v1878 = vsel %vm1876, %v1870, %v1877
    %vm1879 = vcmp.eq.s32.totalorder %v1874, 2
    %v1880 = vxor.u32 %v1870, 2147483648
    %v1881 = vsel %vm1879, %v1880, %v1871
    %v1882 = vsel %vm1875, %v1878, %v1881
    %v1883 = vsel %vm1872, nan, %v1882
    %1885 = vset.pattern.permute.xlu0 0
    %1886 = vperm.xlu0 %1885, %v41
    %v1887 = vpop.permute.xlu0 %1886
    %v1889 = vmul.f32 %v1887, %v1779
    %v1890 = vmul.f32 %v1887, %v1883
    %v1891 = vmul.f32 %v1889, %v1779
    %v1892 = vmul.f32 %v1890, %v1883
    %v1893 = vadd.f32 %v1663, %v1891
    %v1894 = vadd.f32 %v1665, %v1892
    %v1895 = vpack.c.bf16 %v1893, %v1893
    %v1896 = vpack.c.bf16 %v1894, %v1894
    %1898 = vset.pattern.permute.xlu0 0
    %1899 = vperm.xlu0 %1898, %v43
    %v1900 = vpop.permute.xlu0 %1899
    %v1903 = vunpack.c.h.b16 %v25
    %v1904 = vpack.c.b16 %v1903, %v1903
    %v1906 = vsel %vm1243, %v1904, 0
    %v1909 = vsel %vm962, %v1895, 0
    %v1912 = vsel %vm962, %v1896, 0
    %1914 = vmatprep.subr.bf16.mxu0 %v1912
    %1915 = vmatpush1.bf16.msra.mxu0 %v1909
    %1916 = vmatprep.subr.bf16.mxu0 0
    %1917 = vmatpush1.bf16.msra.mxu0 0
    %1918 = vmatprep.subr.bf16.mxu0 0
    %1919 = vmatpush1.bf16.msra.mxu0 0
    %1920 = vmatprep.subr.bf16.mxu0 0
    %1921 = vmatpush1.bf16.msra.mxu0 0
    %1922 = vmatprep.subr.bf16.mxu0 0
    %1923 = vmatpush1.bf16.msra.mxu0 0
    %1924 = vmatprep.subr.bf16.mxu0 0
    %1925 = vmatpush1.bf16.msra.mxu0 0
    %1926 = vmatprep.subr.bf16.mxu0 0
    %1927 = vmatpush1.bf16.msra.mxu0 0
    %1928 = vmatprep.subr.bf16.mxu0 0
    %1929 = vmatpush1.bf16.msra.mxu0 0
    %1930 = vmatprep.subr.bf16.mxu0 0
    %1931 = vmatpush1.bf16.msra.mxu0 0
    %1932 = vmatprep.subr.bf16.mxu0 0
    %1933 = vmatpush1.bf16.msra.mxu0 0
    %1934 = vmatprep.subr.bf16.mxu0 0
    %1935 = vmatpush1.bf16.msra.mxu0 0
    %1936 = vmatprep.subr.bf16.mxu0 0
    %1937 = vmatpush1.bf16.msra.mxu0 0
    %1938 = vmatprep.subr.bf16.mxu0 0
    %1939 = vmatpush1.bf16.msra.mxu0 0
    %1940 = vmatprep.subr.bf16.mxu0 0
    %1941 = vmatpush1.bf16.msra.mxu0 0
    %1942 = vmatprep.subr.bf16.mxu0 0
    %1943 = vmatpush1.bf16.msra.mxu0 0
    %1944 = vmatprep.subr.bf16.mxu0 0
    %1945 = vmatpush1.bf16.msra.mxu0 0
    %1946 = vmatprep.mubr.bf16.mxu0 0
    %1947 = vmatmul.mubr.bf16.gmra.mrb[0].mxu0 %v1906
    %v1948 = vpop.f32.mrb[0].mxu0
    %v1949 = vadd.f32 %v1900, %v1948
    %v1950 = vpop.f32.mrb[0].mxu0
    %v1951 = vadd.f32 %v1900, %v1950
    %v1952 = vpop.f32.mrb[0].mxu0
    %v1953 = vpop.f32.mrb[0].mxu0
    %1954 = vdwg.mxu0
    %v1955 = vadd.f32 %v1294, %v1949
    %v1956 = vadd.f32 %v1295, %v1951
    %1958 = vset.pattern.permute.xlu0 0
    %1959 = vperm.xlu0 %1958, %v44
    %v1960 = vpop.permute.xlu0 %1959
    %v1962 = vmul.f32 %v1960, %v1955
    %v1963 = vmul.f32 %v1960, %v1956
    %v1964 = vand.u32 2147483647, %v1962
    %vm1965 = vcmp.le.f32.partialorder %v1964, 0.7853982
    %vm1966 = vcmp.lt.s32.totalorder %v1962, 0
    %v1967 = vand.u32 %v1962, 2139095040
    %v1968 = vshrl.u32 %v1967, 23
    %v1969 = vsub.s32 %v1968, 127
    %v1970 = vand.u32 2147483647, %v1962
    %v1971 = vand.u32 %v1970, 8388607
    %v1972 = vor.u32 %v1971, 8388608
    %v1973 = vsub.s32 0, %v1972
    %v1974 = vadd.s32 %v1969, 1
    %vm1975 = vcmp.gt.s32.totalorder %v1974, 0
    %v1976 = vsel %vm1975, %v1974, 0
    %v1977 = vshrl.u32 %v1976, 5
    %v1978 = vand.u32 %v1976, 31
    %v1979 = vsub.s32 32, %v1978
    %v1980 = vshrl.u32 683565275, %v1979
    %v1981 = vshll.u32 683565275, %v1978
    %v1982 = vshrl.u32 2475754826, %v1979
    %v1983 = vor.u32 %v1981, %v1982
    %v1984 = vshll.u32 2475754826, %v1978
    %v1985 = vshrl.u32 2131351028, %v1979
    %v1986 = vor.u32 %v1984, %v1985
    %v1987 = vshll.u32 2131351028, %v1978
    %v1988 = vshrl.u32 2102212464, %v1979
    %v1989 = vor.u32 %v1987, %v1988
    %v1990 = vshll.u32 2102212464, %v1978
    %v1991 = vshrl.u32 920167782, %v1979
    %v1992 = vor.u32 %v1990, %v1991
    %v1993 = vshll.u32 920167782, %v1978
    %v1994 = vshrl.u32 1326507024, %v1979
    %v1995 = vor.u32 %v1993, %v1994
    %vm1996 = vcmp.lt.s32.totalorder %v1977, 1
    %vm1997 = vcmp.lt.s32.totalorder %v1977, 2
    %vm1998 = vcmp.lt.s32.totalorder %v1977, 3
    %vm1999 = vcmp.lt.s32.totalorder %v1977, 4
    %v2000 = vsel %vm1996, %v1980, %v1983
    %v2001 = vsel %vm1999, %v1989, 2102212464
    %v2002 = vsel %vm1998, %v1986, %v2001
    %v2003 = vsel %vm1997, %v2000, %v2002
    %v2004 = vsel %vm1996, %v1983, %v1986
    %v2005 = vsel %vm1999, %v1992, 920167782
    %v2006 = vsel %vm1998, %v1989, %v2005
    %v2007 = vsel %vm1997, %v2004, %v2006
    %v2008 = vsel %vm1996, %v1986, %v1989
    %v2009 = vsel %vm1999, %v1995, 1326507024
    %v2010 = vsel %vm1998, %v1992, %v2009
    %v2011 = vsel %vm1997, %v2008, %v2010
    %v2012 = vshll.u32 %v1972, 8
    %v2013 = vmul.u32.u64.compose %v2012, %v2011
    %v2014 = vextract.low.u32 %v2013
    %v2015 = vextract.high.u32 %v2013
    %v2016 = vmul.u32.u64.compose %v2012, %v2007
    %v2017 = vextract.low.u32 %v2016
    %v2018 = vextract.high.u32 %v2016
    %v2019 = vmul.u32 %v2012, %v2003
    %v2020 = vadd.s32 %v2015, %v2017
    %vm2021 = vc.u32 %v2015, %v2017
    %v2022 = vadd.s32 %v2018, 1
    %v2023 = vsel %vm2021, %v2022, %v2018
    %v2024 = vadd.s32 %v2019, %v2023
    %v2025 = vadd.s32 %v2024, 536870912
    %v2026 = vshrl.u32 %v2025, 30
    %v2027 = vshll.u32 %v2026, 30
    %v2028 = vsub.s32 %v2024, %v2027
    %vm2029 = vcmp.lt.s32.totalorder %v2028, 0
    %v2030 = vsub.s32 0, %v2028
    %v2031 = vsel %vm2029, %v2030, %v2028
    %v2032 = vclz %v2031
    %v2033 = vsub.s32 %v2032, 2
    %vm2034 = vcmp.gt.s32.totalorder 0, %v2033
    %v2035 = vsel %vm2034, 0, %v2033
    %v2036 = vsub.s32 32, %v2035
    %v2037 = vshll.u32 %v2028, %v2035
    %v2038 = vshrl.u32 %v2020, %v2036
    %v2039 = vor.u32 %v2037, %v2038
    %v2040 = vsub.s32 4294967266, %v2035
    %v2041 = vadd.s32 %v2040, 127
    %v2042 = vshll.u32 %v2041, 23
    %v2043 = vor.u32 4788187, %v2042
    %v2044 = vand.u32 2147483647, %v2043
    %v2046 = vcvt.s32.f32 %v2039
    %v2047 = vmul.f32 %v2046, %v2044
    %v2048 = vxor.u32 %v2047, 2147483648
    %v2049 = vsel %vm1966, %v2048, %v2047
    %v2050 = vsub.s32 4, %v2026
    %v2051 = vsel %vm1966, %v2050, %v2026
    %v2052 = vsel %vm1965, %v1962, %v2049
    %v2053 = vsel %vm1965, 0, %v2051
    %v2054 = vcosq.f32.pop %v2052
    %v2055 = vsinq.f32.pop %v2052
    %vm2056 = vweird.f32 %v1962
    %v2057 = vadd.s32 %v2053, 3
    %v2058 = vand.u32 %v2057, 3
    %vm2059 = vcmp.lt.s32.totalorder %v2058, 2
    %vm2060 = vcmp.eq.s32.totalorder %v2058, 0
    %v2061 = vxor.u32 %v2055, 2147483648
    %v2062 = vsel %vm2060, %v2054, %v2061
    %vm2063 = vcmp.eq.s32.totalorder %v2058, 2
    %v2064 = vxor.u32 %v2054, 2147483648
    %v2065 = vsel %vm2063, %v2064, %v2055
    %v2066 = vsel %vm2059, %v2062, %v2065
    %v2067 = vsel %vm2056, nan, %v2066
    %v2068 = vand.u32 2147483647, %v1963
    %vm2069 = vcmp.le.f32.partialorder %v2068, 0.7853982
    %vm2070 = vcmp.lt.s32.totalorder %v1963, 0
    %v2071 = vand.u32 %v1963, 2139095040
    %v2072 = vshrl.u32 %v2071, 23
    %v2073 = vsub.s32 %v2072, 127
    %v2074 = vand.u32 2147483647, %v1963
    %v2075 = vand.u32 %v2074, 8388607
    %v2076 = vor.u32 %v2075, 8388608
    %v2077 = vsub.s32 0, %v2076
    %v2078 = vadd.s32 %v2073, 1
    %vm2079 = vcmp.gt.s32.totalorder %v2078, 0
    %v2080 = vsel %vm2079, %v2078, 0
    %v2081 = vshrl.u32 %v2080, 5
    %v2082 = vand.u32 %v2080, 31
    %v2083 = vsub.s32 32, %v2082
    %v2084 = vshrl.u32 683565275, %v2083
    %v2085 = vshll.u32 683565275, %v2082
    %v2086 = vshrl.u32 2475754826, %v2083
    %v2087 = vor.u32 %v2085, %v2086
    %v2088 = vshll.u32 2475754826, %v2082
    %v2089 = vshrl.u32 2131351028, %v2083
    %v2090 = vor.u32 %v2088, %v2089
    %v2091 = vshll.u32 2131351028, %v2082
    %v2092 = vshrl.u32 2102212464, %v2083
    %v2093 = vor.u32 %v2091, %v2092
    %v2094 = vshll.u32 2102212464, %v2082
    %v2095 = vshrl.u32 920167782, %v2083
    %v2096 = vor.u32 %v2094, %v2095
    %v2097 = vshll.u32 920167782, %v2082
    %v2098 = vshrl.u32 1326507024, %v2083
    %v2099 = vor.u32 %v2097, %v2098
    %vm2100 = vcmp.lt.s32.totalorder %v2081, 1
    %vm2101 = vcmp.lt.s32.totalorder %v2081, 2
    %vm2102 = vcmp.lt.s32.totalorder %v2081, 3
    %vm2103 = vcmp.lt.s32.totalorder %v2081, 4
    %v2104 = vsel %vm2100, %v2084, %v2087
    %v2105 = vsel %vm2103, %v2093, 2102212464
    %v2106 = vsel %vm2102, %v2090, %v2105
    %v2107 = vsel %vm2101, %v2104, %v2106
    %v2108 = vsel %vm2100, %v2087, %v2090
    %v2109 = vsel %vm2103, %v2096, 920167782
    %v2110 = vsel %vm2102, %v2093, %v2109
    %v2111 = vsel %vm2101, %v2108, %v2110
    %v2112 = vsel %vm2100, %v2090, %v2093
    %v2113 = vsel %vm2103, %v2099, 1326507024
    %v2114 = vsel %vm2102, %v2096, %v2113
    %v2115 = vsel %vm2101, %v2112, %v2114
    %v2116 = vshll.u32 %v2076, 8
    %v2117 = vmul.u32.u64.compose %v2116, %v2115
    %v2118 = vextract.low.u32 %v2117
    %v2119 = vextract.high.u32 %v2117
    %v2120 = vmul.u32.u64.compose %v2116, %v2111
    %v2121 = vextract.low.u32 %v2120
    %v2122 = vextract.high.u32 %v2120
    %v2123 = vmul.u32 %v2116, %v2107
    %v2124 = vadd.s32 %v2119, %v2121
    %vm2125 = vc.u32 %v2119, %v2121
    %v2126 = vadd.s32 %v2122, 1
    %v2127 = vsel %vm2125, %v2126, %v2122
    %v2128 = vadd.s32 %v2123, %v2127
    %v2129 = vadd.s32 %v2128, 536870912
    %v2130 = vshrl.u32 %v2129, 30
    %v2131 = vshll.u32 %v2130, 30
    %v2132 = vsub.s32 %v2128, %v2131
    %vm2133 = vcmp.lt.s32.totalorder %v2132, 0
    %v2134 = vsub.s32 0, %v2132
    %v2135 = vsel %vm2133, %v2134, %v2132
    %v2136 = vclz %v2135
    %v2137 = vsub.s32 %v2136, 2
    %vm2138 = vcmp.gt.s32.totalorder 0, %v2137
    %v2139 = vsel %vm2138, 0, %v2137
    %v2140 = vsub.s32 32, %v2139
    %v2141 = vshll.u32 %v2132, %v2139
    %v2142 = vshrl.u32 %v2124, %v2140
    %v2143 = vor.u32 %v2141, %v2142
    %v2144 = vsub.s32 4294967266, %v2139
    %v2145 = vadd.s32 %v2144, 127
    %v2146 = vshll.u32 %v2145, 23
    %v2147 = vor.u32 4788187, %v2146
    %v2148 = vand.u32 2147483647, %v2147
    %v2150 = vcvt.s32.f32 %v2143
    %v2151 = vmul.f32 %v2150, %v2148
    %v2152 = vxor.u32 %v2151, 2147483648
    %v2153 = vsel %vm2070, %v2152, %v2151
    %v2154 = vsub.s32 4, %v2130
    %v2155 = vsel %vm2070, %v2154, %v2130
    %v2156 = vsel %vm2069, %v1963, %v2153
    %v2157 = vsel %vm2069, 0, %v2155
    %v2158 = vcosq.f32.pop %v2156
    %v2159 = vsinq.f32.pop %v2156
    %vm2160 = vweird.f32 %v1963
    %v2161 = vadd.s32 %v2157, 3
    %v2162 = vand.u32 %v2161, 3
    %vm2163 = vcmp.lt.s32.totalorder %v2162, 2
    %vm2164 = vcmp.eq.s32.totalorder %v2162, 0
    %v2165 = vxor.u32 %v2159, 2147483648
    %v2166 = vsel %vm2164, %v2158, %v2165
    %vm2167 = vcmp.eq.s32.totalorder %v2162, 2
    %v2168 = vxor.u32 %v2158, 2147483648
    %v2169 = vsel %vm2167, %v2168, %v2159
    %v2170 = vsel %vm2163, %v2166, %v2169
    %v2171 = vsel %vm2160, nan, %v2170
    %2173 = vset.pattern.permute.xlu0 0
    %2174 = vperm.xlu0 %2173, %v45
    %v2175 = vpop.permute.xlu0 %2174
    %v2177 = vmul.f32 %v2175, %v2067
    %v2178 = vmul.f32 %v2175, %v2171
    %v2179 = vmul.f32 %v2177, %v2067
    %v2180 = vmul.f32 %v2178, %v2171
    %v2181 = vadd.f32 %v1955, %v2179
    %v2182 = vadd.f32 %v1956, %v2180
    %2183 = vrot.lane.b32.xlu0 %v2181, 27
    %v2184 = vpop.permute.xlu0 %2183
    %2185 = vrot.lane.b32.xlu0 %v2182, 27
    %v2186 = vpop.permute.xlu0 %2185
    %vm2187 = vcmp.lt.s32.totalorder %v515, 27
    %v2188 = vsel %vm2187, %v2184, %v2186
    %v2189 = vsel %vm2187, %v2186, %v2184
    %v2190 = vlaneseq
    %v2191 = vshrl.u32 %v2190, 7
    %v2192 = vsub.s32 0, %v2191
    %v2193 = vrot.slane %v19, %v2192
    %v2194 = vlaneseq
    %v2195 = vshrl.u32 %v2194, 7
    %v2196 = vsub.s32 0, %v2195
    %v2197 = vrot.slane %v20, %v2196
    %v2198 = vmul.f32 %v2189, %v2193
    %v2199 = vmul.f32 %v2188, %v2197
    %2200 = vrot.lane.b32.xlu0 %v2181, 18
    %v2201 = vpop.permute.xlu0 %2200
    %2202 = vrot.lane.b32.xlu0 %v2182, 18
    %v2203 = vpop.permute.xlu0 %2202
    %vm2204 = vcmp.lt.s32.totalorder %v515, 18
    %v2205 = vsel %vm2204, %v2201, %v2203
    %v2206 = vsel %vm2204, %v2203, %v2201
    %v2207 = vlaneseq
    %v2208 = vshrl.u32 %v2207, 7
    %v2209 = vsub.s32 1, %v2208
    %v2210 = vrot.slane %v19, %v2209
    %v2211 = vlaneseq
    %v2212 = vshrl.u32 %v2211, 7
    %v2213 = vsub.s32 1, %v2212
    %v2214 = vrot.slane %v20, %v2213
    %v2215 = vmul.f32 %v2206, %v2210
    %v2216 = vmul.f32 %v2205, %v2214
    %2217 = vrot.lane.b32.xlu0 %v2181, 9
    %v2218 = vpop.permute.xlu0 %2217
    %2219 = vrot.lane.b32.xlu0 %v2182, 9
    %v2220 = vpop.permute.xlu0 %2219
    %v2221 = vsel %vm1526, %v2218, %v2220
    %v2222 = vsel %vm1526, %v2220, %v2218
    %v2223 = vmul.f32 %v2222, %v1532
    %v2224 = vmul.f32 %v2221, %v1536
    %2225 = vrot.lane.b32.xlu0 %v2181, 119
    %v2226 = vpop.permute.xlu0 %2225
    %2227 = vrot.lane.b32.xlu0 %v2182, 119
    %v2228 = vpop.permute.xlu0 %2227
    %v2229 = vsel %vm1593, %v2226, %v2228
    %v2230 = vsel %vm1593, %v2228, %v2226
    %v2231 = vmul.f32 %v2229, %v1599
    %v2232 = vmul.f32 %v2230, %v1603
    %2233 = vrot.lane.b32.xlu0 %v2181, 110
    %v2234 = vpop.permute.xlu0 %2233
    %2235 = vrot.lane.b32.xlu0 %v2182, 110
    %v2236 = vpop.permute.xlu0 %2235
    %vm2237 = vcmp.lt.s32.totalorder %v515, 110
    %v2238 = vsel %vm2237, %v2234, %v2236
    %v2239 = vsel %vm2237, %v2236, %v2234
    %v2240 = vlaneseq
    %v2241 = vshrl.u32 %v2240, 7
    %v2242 = vsub.s32 4, %v2241
    %v2243 = vrot.slane %v21, %v2242
    %v2244 = vlaneseq
    %v2245 = vshrl.u32 %v2244, 7
    %v2246 = vsub.s32 4, %v2245
    %v2247 = vrot.slane %v22, %v2246
    %v2248 = vmul.f32 %v2238, %v2243
    %v2249 = vmul.f32 %v2239, %v2247
    %2250 = vrot.lane.b32.xlu0 %v2181, 101
    %v2251 = vpop.permute.xlu0 %2250
    %2252 = vrot.lane.b32.xlu0 %v2182, 101
    %v2253 = vpop.permute.xlu0 %2252
    %vm2254 = vcmp.lt.s32.totalorder %v515, 101
    %v2255 = vsel %vm2254, %v2251, %v2253
    %v2256 = vsel %vm2254, %v2253, %v2251
    %v2257 = vlaneseq
    %v2258 = vshrl.u32 %v2257, 7
    %v2259 = vsub.s32 5, %v2258
    %v2260 = vrot.slane %v21, %v2259
    %v2261 = vlaneseq
    %v2262 = vshrl.u32 %v2261, 7
    %v2263 = vsub.s32 5, %v2262
    %v2264 = vrot.slane %v22, %v2263
    %v2265 = vmul.f32 %v2255, %v2260
    %v2266 = vmul.f32 %v2256, %v2264
    %v2267 = vpack.c.bf16 %v2215, %v2198
    %v2268 = vpack.c.bf16 %v2216, %v2199
    %v2269 = vpack.c.bf16 %v2181, %v2223
    %v2270 = vpack.c.bf16 %v2182, %v2224
    %v2271 = vpack.c.bf16 %v2248, %v2231
    %v2272 = vpack.c.bf16 %v2249, %v2232
    %v2273 = vpack.c.bf16 %v2265, %v2265
    %v2274 = vpack.c.bf16 %v2266, %v2266
    %2276 = vset.pattern.permute.xlu0 0
    %2277 = vperm.xlu0 %2276, %v48
    %v2278 = vpop.permute.xlu0 %2277
    %v2281 = vunpack.c.h.b16 %v24
    %v2282 = vpack.c.b16 %v2281, %v2281
    %v2284 = vsel %vm958, %v2282, 0
    %v2287 = vsel %vm962, %v2273, 0
    %v2290 = vsel %vm962, %v2274, 0
    %2292 = vmatprep.subr.bf16.mxu0 %v2268
    %2293 = vmatpush1.bf16.msra.mxu0 %v2267
    %2294 = vmatprep.subr.bf16.mxu0 %v2270
    %2295 = vmatpush1.bf16.msra.mxu0 %v2269
    %2296 = vmatprep.subr.bf16.mxu0 %v2272
    %2297 = vmatpush1.bf16.msra.mxu0 %v2271
    %2298 = vmatprep.subr.bf16.mxu0 %v2290
    %2299 = vmatpush1.bf16.msra.mxu0 %v2287
    %2300 = vmatprep.subr.bf16.mxu0 0
    %2301 = vmatpush1.bf16.msra.mxu0 0
    %2302 = vmatprep.subr.bf16.mxu0 0
    %2303 = vmatpush1.bf16.msra.mxu0 0
    %2304 = vmatprep.subr.bf16.mxu0 0
    %2305 = vmatpush1.bf16.msra.mxu0 0
    %2306 = vmatprep.subr.bf16.mxu0 0
    %2307 = vmatpush1.bf16.msra.mxu0 0
    %2308 = vmatprep.subr.bf16.mxu0 0
    %2309 = vmatpush1.bf16.msra.mxu0 0
    %2310 = vmatprep.subr.bf16.mxu0 0
    %2311 = vmatpush1.bf16.msra.mxu0 0
    %2312 = vmatprep.subr.bf16.mxu0 0
    %2313 = vmatpush1.bf16.msra.mxu0 0
    %2314 = vmatprep.subr.bf16.mxu0 0
    %2315 = vmatpush1.bf16.msra.mxu0 0
    %2316 = vmatprep.subr.bf16.mxu0 0
    %2317 = vmatpush1.bf16.msra.mxu0 0
    %2318 = vmatprep.subr.bf16.mxu0 0
    %2319 = vmatpush1.bf16.msra.mxu0 0
    %2320 = vmatprep.subr.bf16.mxu0 0
    %2321 = vmatpush1.bf16.msra.mxu0 0
    %2322 = vmatprep.subr.bf16.mxu0 0
    %2323 = vmatpush1.bf16.msra.mxu0 0
    %2324 = vmatprep.mubr.bf16.mxu0 0
    %2325 = vmatmul.mubr.bf16.gmra.mrb[0].mxu0 %v2284
    %v2326 = vpop.f32.mrb[0].mxu0
    %v2327 = vadd.f32 %v2278, %v2326
    %v2328 = vpop.f32.mrb[0].mxu0
    %v2329 = vadd.f32 %v2278, %v2328
    %v2330 = vpop.f32.mrb[0].mxu0
    %v2331 = vpop.f32.mrb[0].mxu0
    %2332 = vdwg.mxu0
    %2334 = vset.pattern.permute.xlu0 0
    %2335 = vperm.xlu0 %2334, %v46
    %v2336 = vpop.permute.xlu0 %2335
    %v2338 = vmul.f32 %v2336, %v2327
    %v2339 = vmul.f32 %v2336, %v2329
    %v2340 = vand.u32 2147483647, %v2338
    %vm2341 = vcmp.le.f32.partialorder %v2340, 0.7853982
    %vm2342 = vcmp.lt.s32.totalorder %v2338, 0
    %v2343 = vand.u32 %v2338, 2139095040
    %v2344 = vshrl.u32 %v2343, 23
    %v2345 = vsub.s32 %v2344, 127
    %v2346 = vand.u32 2147483647, %v2338
    %v2347 = vand.u32 %v2346, 8388607
    %v2348 = vor.u32 %v2347, 8388608
    %v2349 = vsub.s32 0, %v2348
    %v2350 = vadd.s32 %v2345, 1
    %vm2351 = vcmp.gt.s32.totalorder %v2350, 0
    %v2352 = vsel %vm2351, %v2350, 0
    %v2353 = vshrl.u32 %v2352, 5
    %v2354 = vand.u32 %v2352, 31
    %v2355 = vsub.s32 32, %v2354
    %v2356 = vshrl.u32 683565275, %v2355
    %v2357 = vshll.u32 683565275, %v2354
    %v2358 = vshrl.u32 2475754826, %v2355
    %v2359 = vor.u32 %v2357, %v2358
    %v2360 = vshll.u32 2475754826, %v2354
    %v2361 = vshrl.u32 2131351028, %v2355
    %v2362 = vor.u32 %v2360, %v2361
    %v2363 = vshll.u32 2131351028, %v2354
    %v2364 = vshrl.u32 2102212464, %v2355
    %v2365 = vor.u32 %v2363, %v2364
    %v2366 = vshll.u32 2102212464, %v2354
    %v2367 = vshrl.u32 920167782, %v2355
    %v2368 = vor.u32 %v2366, %v2367
    %v2369 = vshll.u32 920167782, %v2354
    %v2370 = vshrl.u32 1326507024, %v2355
    %v2371 = vor.u32 %v2369, %v2370
    %vm2372 = vcmp.lt.s32.totalorder %v2353, 1
    %vm2373 = vcmp.lt.s32.totalorder %v2353, 2
    %vm2374 = vcmp.lt.s32.totalorder %v2353, 3
    %vm2375 = vcmp.lt.s32.totalorder %v2353, 4
    %v2376 = vsel %vm2372, %v2356, %v2359
    %v2377 = vsel %vm2375, %v2365, 2102212464
    %v2378 = vsel %vm2374, %v2362, %v2377
    %v2379 = vsel %vm2373, %v2376, %v2378
    %v2380 = vsel %vm2372, %v2359, %v2362
    %v2381 = vsel %vm2375, %v2368, 920167782
    %v2382 = vsel %vm2374, %v2365, %v2381
    %v2383 = vsel %vm2373, %v2380, %v2382
    %v2384 = vsel %vm2372, %v2362, %v2365
    %v2385 = vsel %vm2375, %v2371, 1326507024
    %v2386 = vsel %vm2374, %v2368, %v2385
    %v2387 = vsel %vm2373, %v2384, %v2386
    %v2388 = vshll.u32 %v2348, 8
    %v2389 = vmul.u32.u64.compose %v2388, %v2387
    %v2390 = vextract.low.u32 %v2389
    %v2391 = vextract.high.u32 %v2389
    %v2392 = vmul.u32.u64.compose %v2388, %v2383
    %v2393 = vextract.low.u32 %v2392
    %v2394 = vextract.high.u32 %v2392
    %v2395 = vmul.u32 %v2388, %v2379
    %v2396 = vadd.s32 %v2391, %v2393
    %vm2397 = vc.u32 %v2391, %v2393
    %v2398 = vadd.s32 %v2394, 1
    %v2399 = vsel %vm2397, %v2398, %v2394
    %v2400 = vadd.s32 %v2395, %v2399
    %v2401 = vadd.s32 %v2400, 536870912
    %v2402 = vshrl.u32 %v2401, 30
    %v2403 = vshll.u32 %v2402, 30
    %v2404 = vsub.s32 %v2400, %v2403
    %vm2405 = vcmp.lt.s32.totalorder %v2404, 0
    %v2406 = vsub.s32 0, %v2404
    %v2407 = vsel %vm2405, %v2406, %v2404
    %v2408 = vclz %v2407
    %v2409 = vsub.s32 %v2408, 2
    %vm2410 = vcmp.gt.s32.totalorder 0, %v2409
    %v2411 = vsel %vm2410, 0, %v2409
    %v2412 = vsub.s32 32, %v2411
    %v2413 = vshll.u32 %v2404, %v2411
    %v2414 = vshrl.u32 %v2396, %v2412
    %v2415 = vor.u32 %v2413, %v2414
    %v2416 = vsub.s32 4294967266, %v2411
    %v2417 = vadd.s32 %v2416, 127
    %v2418 = vshll.u32 %v2417, 23
    %v2419 = vor.u32 4788187, %v2418
    %v2420 = vand.u32 2147483647, %v2419
    %v2422 = vcvt.s32.f32 %v2415
    %v2423 = vmul.f32 %v2422, %v2420
    %v2424 = vxor.u32 %v2423, 2147483648
    %v2425 = vsel %vm2342, %v2424, %v2423
    %v2426 = vsub.s32 4, %v2402
    %v2427 = vsel %vm2342, %v2426, %v2402
    %v2428 = vsel %vm2341, %v2338, %v2425
    %v2429 = vsel %vm2341, 0, %v2427
    %v2430 = vcosq.f32.pop %v2428
    %v2431 = vsinq.f32.pop %v2428
    %vm2432 = vweird.f32 %v2338
    %v2433 = vadd.s32 %v2429, 3
    %v2434 = vand.u32 %v2433, 3
    %vm2435 = vcmp.lt.s32.totalorder %v2434, 2
    %vm2436 = vcmp.eq.s32.totalorder %v2434, 0
    %v2437 = vxor.u32 %v2431, 2147483648
    %v2438 = vsel %vm2436, %v2430, %v2437
    %vm2439 = vcmp.eq.s32.totalorder %v2434, 2
    %v2440 = vxor.u32 %v2430, 2147483648
    %v2441 = vsel %vm2439, %v2440, %v2431
    %v2442 = vsel %vm2435, %v2438, %v2441
    %v2443 = vsel %vm2432, nan, %v2442
    %v2444 = vand.u32 2147483647, %v2339
    %vm2445 = vcmp.le.f32.partialorder %v2444, 0.7853982
    %vm2446 = vcmp.lt.s32.totalorder %v2339, 0
    %v2447 = vand.u32 %v2339, 2139095040
    %v2448 = vshrl.u32 %v2447, 23
    %v2449 = vsub.s32 %v2448, 127
    %v2450 = vand.u32 2147483647, %v2339
    %v2451 = vand.u32 %v2450, 8388607
    %v2452 = vor.u32 %v2451, 8388608
    %v2453 = vsub.s32 0, %v2452
    %v2454 = vadd.s32 %v2449, 1
    %vm2455 = vcmp.gt.s32.totalorder %v2454, 0
    %v2456 = vsel %vm2455, %v2454, 0
    %v2457 = vshrl.u32 %v2456, 5
    %v2458 = vand.u32 %v2456, 31
    %v2459 = vsub.s32 32, %v2458
    %v2460 = vshrl.u32 683565275, %v2459
    %v2461 = vshll.u32 683565275, %v2458
    %v2462 = vshrl.u32 2475754826, %v2459
    %v2463 = vor.u32 %v2461, %v2462
    %v2464 = vshll.u32 2475754826, %v2458
    %v2465 = vshrl.u32 2131351028, %v2459
    %v2466 = vor.u32 %v2464, %v2465
    %v2467 = vshll.u32 2131351028, %v2458
    %v2468 = vshrl.u32 2102212464, %v2459
    %v2469 = vor.u32 %v2467, %v2468
    %v2470 = vshll.u32 2102212464, %v2458
    %v2471 = vshrl.u32 920167782, %v2459
    %v2472 = vor.u32 %v2470, %v2471
    %v2473 = vshll.u32 920167782, %v2458
    %v2474 = vshrl.u32 1326507024, %v2459
    %v2475 = vor.u32 %v2473, %v2474
    %vm2476 = vcmp.lt.s32.totalorder %v2457, 1
    %vm2477 = vcmp.lt.s32.totalorder %v2457, 2
    %vm2478 = vcmp.lt.s32.totalorder %v2457, 3
    %vm2479 = vcmp.lt.s32.totalorder %v2457, 4
    %v2480 = vsel %vm2476, %v2460, %v2463
    %v2481 = vsel %vm2479, %v2469, 2102212464
    %v2482 = vsel %vm2478, %v2466, %v2481
    %v2483 = vsel %vm2477, %v2480, %v2482
    %v2484 = vsel %vm2476, %v2463, %v2466
    %v2485 = vsel %vm2479, %v2472, 920167782
    %v2486 = vsel %vm2478, %v2469, %v2485
    %v2487 = vsel %vm2477, %v2484, %v2486
    %v2488 = vsel %vm2476, %v2466, %v2469
    %v2489 = vsel %vm2479, %v2475, 1326507024
    %v2490 = vsel %vm2478, %v2472, %v2489
    %v2491 = vsel %vm2477, %v2488, %v2490
    %v2492 = vshll.u32 %v2452, 8
    %v2493 = vmul.u32.u64.compose %v2492, %v2491
    %v2494 = vextract.low.u32 %v2493
    %v2495 = vextract.high.u32 %v2493
    %v2496 = vmul.u32.u64.compose %v2492, %v2487
    %v2497 = vextract.low.u32 %v2496
    %v2498 = vextract.high.u32 %v2496
    %v2499 = vmul.u32 %v2492, %v2483
    %v2500 = vadd.s32 %v2495, %v2497
    %vm2501 = vc.u32 %v2495, %v2497
    %v2502 = vadd.s32 %v2498, 1
    %v2503 = vsel %vm2501, %v2502, %v2498
    %v2504 = vadd.s32 %v2499, %v2503
    %v2505 = vadd.s32 %v2504, 536870912
    %v2506 = vshrl.u32 %v2505, 30
    %v2507 = vshll.u32 %v2506, 30
    %v2508 = vsub.s32 %v2504, %v2507
    %vm2509 = vcmp.lt.s32.totalorder %v2508, 0
    %v2510 = vsub.s32 0, %v2508
    %v2511 = vsel %vm2509, %v2510, %v2508
    %v2512 = vclz %v2511
    %v2513 = vsub.s32 %v2512, 2
    %vm2514 = vcmp.gt.s32.totalorder 0, %v2513
    %v2515 = vsel %vm2514, 0, %v2513
    %v2516 = vsub.s32 32, %v2515
    %v2517 = vshll.u32 %v2508, %v2515
    %v2518 = vshrl.u32 %v2500, %v2516
    %v2519 = vor.u32 %v2517, %v2518
    %v2520 = vsub.s32 4294967266, %v2515
    %v2521 = vadd.s32 %v2520, 127
    %v2522 = vshll.u32 %v2521, 23
    %v2523 = vor.u32 4788187, %v2522
    %v2524 = vand.u32 2147483647, %v2523
    %v2526 = vcvt.s32.f32 %v2519
    %v2527 = vmul.f32 %v2526, %v2524
    %v2528 = vxor.u32 %v2527, 2147483648
    %v2529 = vsel %vm2446, %v2528, %v2527
    %v2530 = vsub.s32 4, %v2506
    %v2531 = vsel %vm2446, %v2530, %v2506
    %v2532 = vsel %vm2445, %v2339, %v2529
    %v2533 = vsel %vm2445, 0, %v2531
    %v2534 = vcosq.f32.pop %v2532
    %v2535 = vsinq.f32.pop %v2532
    %vm2536 = vweird.f32 %v2339
    %v2537 = vadd.s32 %v2533, 3
    %v2538 = vand.u32 %v2537, 3
    %vm2539 = vcmp.lt.s32.totalorder %v2538, 2
    %vm2540 = vcmp.eq.s32.totalorder %v2538, 0
    %v2541 = vxor.u32 %v2535, 2147483648
    %v2542 = vsel %vm2540, %v2534, %v2541
    %vm2543 = vcmp.eq.s32.totalorder %v2538, 2
    %v2544 = vxor.u32 %v2534, 2147483648
    %v2545 = vsel %vm2543, %v2544, %v2535
    %v2546 = vsel %vm2539, %v2542, %v2545
    %v2547 = vsel %vm2536, nan, %v2546
    %2549 = vset.pattern.permute.xlu0 0
    %2550 = vperm.xlu0 %2549, %v47
    %v2551 = vpop.permute.xlu0 %2550
    %v2553 = vmul.f32 %v2551, %v2443
    %v2554 = vmul.f32 %v2551, %v2547
    %v2555 = vmul.f32 %v2553, %v2443
    %v2556 = vmul.f32 %v2554, %v2547
    %v2557 = vadd.f32 %v2327, %v2555
    %v2558 = vadd.f32 %v2329, %v2556
    %v2559 = vpack.c.bf16 %v2557, %v2557
    %v2560 = vpack.c.bf16 %v2558, %v2558
    %2562 = vset.pattern.permute.xlu0 0
    %2563 = vperm.xlu0 %2562, %v49
    %v2564 = vpop.permute.xlu0 %2563
    %v2567 = vsel %vm1243, %v26, 0
    %v2570 = vsel %vm962, %v2559, 0
    %v2573 = vsel %vm962, %v2560, 0
    %2575 = vmatprep.subr.bf16.mxu0 %v2573
    %2576 = vmatpush1.bf16.msra.mxu0 %v2570
    %2577 = vmatprep.subr.bf16.mxu0 0
    %2578 = vmatpush1.bf16.msra.mxu0 0
    %2579 = vmatprep.subr.bf16.mxu0 0
    %2580 = vmatpush1.bf16.msra.mxu0 0
    %2581 = vmatprep.subr.bf16.mxu0 0
    %2582 = vmatpush1.bf16.msra.mxu0 0
    %2583 = vmatprep.subr.bf16.mxu0 0
    %2584 = vmatpush1.bf16.msra.mxu0 0
    %2585 = vmatprep.subr.bf16.mxu0 0
    %2586 = vmatpush1.bf16.msra.mxu0 0
    %2587 = vmatprep.subr.bf16.mxu0 0
    %2588 = vmatpush1.bf16.msra.mxu0 0
    %2589 = vmatprep.subr.bf16.mxu0 0
    %2590 = vmatpush1.bf16.msra.mxu0 0
    %2591 = vmatprep.subr.bf16.mxu0 0
    %2592 = vmatpush1.bf16.msra.mxu0 0
    %2593 = vmatprep.subr.bf16.mxu0 0
    %2594 = vmatpush1.bf16.msra.mxu0 0
    %2595 = vmatprep.subr.bf16.mxu0 0
    %2596 = vmatpush1.bf16.msra.mxu0 0
    %2597 = vmatprep.subr.bf16.mxu0 0
    %2598 = vmatpush1.bf16.msra.mxu0 0
    %2599 = vmatprep.subr.bf16.mxu0 0
    %2600 = vmatpush1.bf16.msra.mxu0 0
    %2601 = vmatprep.subr.bf16.mxu0 0
    %2602 = vmatpush1.bf16.msra.mxu0 0
    %2603 = vmatprep.subr.bf16.mxu0 0
    %2604 = vmatpush1.bf16.msra.mxu0 0
    %2605 = vmatprep.subr.bf16.mxu0 0
    %2606 = vmatpush1.bf16.msra.mxu0 0
    %2607 = vmatprep.mubr.bf16.mxu0 0
    %2608 = vmatmul.mubr.bf16.gmra.mrb[0].mxu0 %v2567
    %v2609 = vpop.f32.mrb[0].mxu0
    %v2610 = vadd.f32 %v2564, %v2609
    %v2611 = vpop.f32.mrb[0].mxu0
    %v2612 = vadd.f32 %v2564, %v2611
    %v2613 = vpop.f32.mrb[0].mxu0
    %v2614 = vpop.f32.mrb[0].mxu0
    %2615 = vdwg.mxu0
    %v2616 = vadd.f32 %v1955, %v2610
    %v2617 = vadd.f32 %v1956, %v2612
    %2618 = vst [vmem:[#allocation2] sm:$0xff] %v2616
    %2619 = vst [vmem:[#allocation2 + $0x8] sm:$0xff] %v2617
    // Predicated region
    $region18: #{decoder_block_forward.1} parent=1 // pred_check
      _
    $region19: #{decoder_block_forward.1} parent=1 // pred_check_branch
      %2621 = sbr.rel (0) target = $region21
    $region20: #{decoder_block_forward.1} parent=1 // pred_region
      %s2623 = ssub.s32 256, 256
      %2624 = vsyncadd [#allocation3], %s2623
      %s2626 = sshll.u32 [#allocation2], 4
      %s2627 = int_to_ptr.vmem [resolvable:$true] %s2626
      %2629 = dma.vmem_to_hbm [thread:$0]  %s2627, 256, %s4, [#allocation3]
    $region21: #{decoder_block_forward.1} parent=1 // pred_fallthru
      _
    // Predicated region
    $region22: #{decoder_block_forward.1} parent=1 // pred_check
      _
    $region23: #{decoder_block_forward.1} parent=1 // pred_check_branch
      %2631 = sbr.rel (0) target = $region25
    $region24: #{decoder_block_forward.1} parent=1 // pred_region
      %2632 = dma.done [#allocation3], 256
    $region25: #{decoder_block_forward.1} parent=1 // pred_fallthru
      _
    %2633 = vsyncpa [#allocation3], 1

</llo_original>
